<compile_context>
chip_gen: v7x
topology: tpu7x:2x2x1
jax: 0.10.0
libtpu: 0.0.40
codegen_flags: <defaults>
</compile_context>

<pallas_src>
import jax
import jax.numpy as jnp
from jax.experimental import pallas as pl
from jax.experimental.pallas import tpu as pltpu


def _resize_conv_kernel(xa_ref, xb_ref, w_ref, b_ref, o_ref, p_ref):
    """Fused (nearest x2 upsample -> 3x3 conv pad=1 -> ReLU) for one row tile.

    xa_ref: (1, TH,  W+2, Cin)    row tile of the zero-padded original input (NHWC)
    xb_ref: (1, TH,  W+2, Cin)    next row tile; only its first 2 rows (halo) are used
    w_ref : (2, 9*Cin, 2*Cout)    upsample-folded weights [a, (p*3+q)*Cin+ci, b*Cout+co]
    b_ref : (1, 2*Cout)           bias tiled over the column phase b
    o_ref : (1, TH, 2, W, 2*Cout) output tile, indexed [i, a, j, b*Cout+co]
    p_ref : (TH*W, 9*Cin)         VMEM scratch: im2col patch matrix
    """
    _, TH, Wp, Cin = xa_ref.shape
    W = Wp - 2
    two_cout = o_ref.shape[-1]

    # (TH+2, W+2, Cin) window: this tile's rows plus 2 halo rows from the next tile.
    window = jnp.concatenate([xa_ref[0], xb_ref[0, :2]], axis=0)

    # Build the 9-tap im2col patch matrix ONCE (hoisted out of the matmuls).
    for p in range(3):
        for q in range(3):
            t = p * 3 + q
            p_ref[:, t * Cin:(t + 1) * Cin] = (
                window[p:p + TH, q:q + W, :].reshape(TH * W, Cin))

    patches = p_ref[...]
    bias = b_ref[0].astype(jnp.float32)

    # One fat matmul per output row phase `a` (even/odd upsampled rows); the column
    # phase `b` is folded into the output channels, so no interleave is needed here.
    # (For bf16 inputs the MXU runs bf16 natively; f32 accumulation via preferred_element_type.)
    for a in range(2):
        acc = jnp.dot(patches, w_ref[a], preferred_element_type=jnp.float32)
        acc = jnp.maximum(acc + bias, 0.0)  # bias + ReLU
        o_ref[0, :, a, :, :] = acc.reshape(TH, W, two_cout).astype(o_ref.dtype)


def resize_conv(x_nchw, weight_oihw, bias, scale_factor=2, row_tile=None):
    """Forward of ResizeConv: nearest-interpolate x2, conv3x3(pad=1), ReLU."""
    if scale_factor != 2:
        # TODO(synk): weight-folding below is derived for nearest x2 only.
        raise NotImplementedError("resize_conv Pallas kernel supports scale_factor=2")

    N, Cin, H, W = x_nchw.shape
    Cout = weight_oihw.shape[0]
    dtype = x_nchw.dtype

    # Row-tile size (original-resolution rows per grid step).
    if row_tile is None:
        cands = [t for t in range(2, min(H, 64) + 1) if H % t == 0]
        row_tile = max(cands) if cands else H
    th = row_tile
    if H % th != 0 or th < 2:
        raise ValueError("row_tile must divide H and be >= 2")
    n_row_tiles = H // th

    # Fold the nearest-x2 upsample into the conv weights.  For output row 2*i + a,
    # tap kh reads padded original row i + (a+kh+1)//2; m[a, p, kh] marks which
    # padded-row offset p each kh maps to (same matrix for columns / kw).
    m = jnp.array(
        [[[1., 0., 0.],
          [0., 1., 1.],
          [0., 0., 0.]],
         [[0., 0., 0.],
          [1., 1., 0.],
          [0., 0., 1.]]], dtype=jnp.float32)            # m[a, p, kh]
    w_hwio = jnp.transpose(weight_oihw, (2, 3, 1, 0)).astype(jnp.float32)  # (kh,kw,ci,co)
    # w_folded[a, (p*3+q)*Cin + ci, b*Cout + co]
    w_folded = jnp.einsum('apk,bql,klio->apqibo', m, m, w_hwio)
    w_folded = w_folded.reshape(2, 9 * Cin, 2 * Cout).astype(dtype)
    bias2 = jnp.tile(bias, 2).reshape(1, 2 * Cout).astype(jnp.float32)

    # NCHW -> NHWC (small, original-resolution) and zero-pad: 1 row/col conv halo
    # plus extra bottom zero rows so every row tile can read the *next* tile as halo.
    x_nhwc = jnp.transpose(x_nchw, (0, 2, 3, 1))
    x_pad = jnp.pad(x_nhwc, ((0, 0), (1, th - 1), (1, 1), (0, 0)))  # (N, H+th, W+2, Cin)

    out5 = pl.pallas_call(
        _resize_conv_kernel,
        out_shape=jax.ShapeDtypeStruct((N, H, 2, W, 2 * Cout), dtype),
        grid=(N, n_row_tiles),
        in_specs=[
            pl.BlockSpec((1, th, W + 2, Cin), lambda n, t: (n, t, 0, 0)),
            pl.BlockSpec((1, th, W + 2, Cin), lambda n, t: (n, t + 1, 0, 0)),
            pl.BlockSpec((2, 9 * Cin, 2 * Cout), lambda n, t: (0, 0, 0)),
            pl.BlockSpec((1, 2 * Cout), lambda n, t: (0, 0)),
        ],
        out_specs=pl.BlockSpec((1, th, 2, W, 2 * Cout),
                               lambda n, t: (n, t, 0, 0, 0)),
        scratch_shapes=[pltpu.VMEM((th * W, 9 * Cin), dtype)],
        compiler_params=pltpu.CompilerParams(
            dimension_semantics=("parallel", "parallel"),
            vmem_limit_bytes=32 * 1024 * 1024),
    )(x_pad, x_pad, w_folded, bias2)

    # (N, H, 2, W, 2*Cout) row-major == (N, 2H, 2W, Cout) row-major: free reshape.
    out_nhwc = out5.reshape(N, 2 * H, 2 * W, Cout)
    # Final layout conversion back to PyTorch's NCHW (one XLA transpose pass).
    return jnp.transpose(out_nhwc, (0, 3, 1, 2))


def _reference(x_nchw, weight_oihw, bias, scale_factor=2):
    x_up = jnp.repeat(jnp.repeat(x_nchw, scale_factor, axis=2),
                      scale_factor, axis=3)
    y = jax.lax.conv_general_dilated(
        x_up.astype(jnp.float32), weight_oihw.astype(jnp.float32),
        window_strides=(1, 1), padding="SAME",
        dimension_numbers=("NCHW", "OIHW", "NCHW"))
    y = y + bias.astype(jnp.float32)[None, :, None, None]
    return jnp.maximum(y, 0.0)


if __name__ == "__main__":
    key = jax.random.PRNGKey(0)
    k_x, k_w, k_b = jax.random.split(key, 3)

    N, Cin, H, W = 2, 4, 16, 16
    Cout = 8
    scale = 2

    x = jax.random.normal(k_x, (N, Cin, H, W), dtype=jnp.float32)
    # Deterministic synthetic conv parameters (shapes match nn.Conv2d(Cin, Cout, 3))
    weight = jax.random.normal(k_w, (Cout, Cin, 3, 3), dtype=jnp.float32) * 0.1
    bias = jax.random.normal(k_b, (Cout,), dtype=jnp.float32) * 0.1

    out = resize_conv(x, weight, bias, scale_factor=scale, row_tile=8)
    out = jax.block_until_ready(out)

    ref = _reference(x, weight, bias, scale_factor=scale)
    assert out.shape == (N, Cout, H * scale, W * scale), out.shape
    max_err = float(jnp.max(jnp.abs(out - ref)))
    assert jnp.allclose(out, ref, atol=2e-4, rtol=2e-4), max_err

    print("KERNEL_OK")
</pallas_src>

<mosaic_0001>
module attributes {stable_mosaic.version = 11 : i64} {
  func.func @_resize_conv_kernel(%arg0: i32, %arg1: i32, %arg2: memref<1x8x18x4xf32, #tpu.memory_space<vmem>>, %arg3: memref<1x8x18x4xf32, #tpu.memory_space<vmem>>, %arg4: memref<2x36x16xf32, #tpu.memory_space<vmem>>, %arg5: memref<1x16xf32, #tpu.memory_space<vmem>>, %arg6: memref<1x8x2x16x16xf32, #tpu.memory_space<vmem>>, %arg7: memref<128x36xf32, #tpu.memory_space<vmem>>) attributes {dimension_semantics = [#tpu.dimension_semantics<parallel>, #tpu.dimension_semantics<parallel>], iteration_bounds = array<i64: 2, 2>, scalar_prefetch = 0 : i64, scratch_operands = 1 : i64, tpu.core_type = #tpu.core_type<tc>, window_params = [{transform_indices = @transform_0, window_bounds = array<i64: 1, 8, 18, 4>}, {transform_indices = @transform_1, window_bounds = array<i64: 1, 8, 18, 4>}, {pipeline_mode = #tpu.pipeline_mode<synchronous>, transform_indices = @transform_2, window_bounds = array<i64: 2, 36, 16>}, {pipeline_mode = #tpu.pipeline_mode<synchronous>, transform_indices = @transform_3, window_bounds = array<i64: 1, 16>}, {transform_indices = @transform_4, window_bounds = array<i64: 1, 8, 2, 16, 16>}]} {
    %c0 = arith.constant 0 : index
    %c0_0 = arith.constant 0 : index
    %c0_1 = arith.constant 0 : index
    %c0_2 = arith.constant 0 : index
    %0 = vector.load %arg2[%c0, %c0_0, %c0_1, %c0_2] : memref<1x8x18x4xf32, #tpu.memory_space<vmem>>, vector<1x8x18x4xf32>
    %1 = vector.shape_cast %0 : vector<1x8x18x4xf32> to vector<8x18x4xf32>
    %c0_3 = arith.constant 0 : index
    %c0_4 = arith.constant 0 : index
    %c0_5 = arith.constant 0 : index
    %c0_6 = arith.constant 0 : index
    %2 = vector.load %arg3[%c0_3, %c0_4, %c0_5, %c0_6] : memref<1x8x18x4xf32, #tpu.memory_space<vmem>>, vector<1x2x18x4xf32>
    %3 = vector.shape_cast %2 : vector<1x2x18x4xf32> to vector<2x18x4xf32>
    %4 = tpu.concatenate %1, %3 in 0 : vector<8x18x4xf32>, vector<2x18x4xf32> -> vector<10x18x4xf32>
    %5 = vector.extract_strided_slice %4 {offsets = [0, 0, 0], sizes = [8, 16, 4], strides = [1, 1, 1]} : vector<10x18x4xf32> to vector<8x16x4xf32>
    %6 = vector.shape_cast %5 : vector<8x16x4xf32> to vector<128x4xf32>
    %c0_7 = arith.constant 0 : index
    %c0_8 = arith.constant 0 : index
    %7 = vector.load %arg7[%c0_7, %c0_8] : memref<128x36xf32, #tpu.memory_space<vmem>>, vector<128x4xf32>
    tpu.vector_store %arg7[%c0_7, %c0_8], %6 {strides = array<i32>} : memref<128x36xf32, #tpu.memory_space<vmem>>, vector<128x4xf32>,
    %8 = vector.extract_strided_slice %4 {offsets = [0, 1, 0], sizes = [8, 16, 4], strides = [1, 1, 1]} : vector<10x18x4xf32> to vector<8x16x4xf32>
    %9 = vector.shape_cast %8 : vector<8x16x4xf32> to vector<128x4xf32>
    %c0_9 = arith.constant 0 : index
    %c4 = arith.constant 4 : index
    %10 = vector.load %arg7[%c0_9, %c4] : memref<128x36xf32, #tpu.memory_space<vmem>>, vector<128x4xf32>
    tpu.vector_store %arg7[%c0_9, %c4], %9 {strides = array<i32>} : memref<128x36xf32, #tpu.memory_space<vmem>>, vector<128x4xf32>,
    %11 = vector.extract_strided_slice %4 {offsets = [0, 2, 0], sizes = [8, 16, 4], strides = [1, 1, 1]} : vector<10x18x4xf32> to vector<8x16x4xf32>
    %12 = vector.shape_cast %11 : vector<8x16x4xf32> to vector<128x4xf32>
    %c0_10 = arith.constant 0 : index
    %c8 = arith.constant 8 : index
    %13 = vector.load %arg7[%c0_10, %c8] : memref<128x36xf32, #tpu.memory_space<vmem>>, vector<128x4xf32>
    tpu.vector_store %arg7[%c0_10, %c8], %12 {strides = array<i32>} : memref<128x36xf32, #tpu.memory_space<vmem>>, vector<128x4xf32>,
    %14 = vector.extract_strided_slice %4 {offsets = [1, 0, 0], sizes = [8, 16, 4], strides = [1, 1, 1]} : vector<10x18x4xf32> to vector<8x16x4xf32>
    %15 = vector.shape_cast %14 : vector<8x16x4xf32> to vector<128x4xf32>
    %c0_11 = arith.constant 0 : index
    %c12 = arith.constant 12 : index
    %16 = vector.load %arg7[%c0_11, %c12] : memref<128x36xf32, #tpu.memory_space<vmem>>, vector<128x4xf32>
    tpu.vector_store %arg7[%c0_11, %c12], %15 {strides = array<i32>} : memref<128x36xf32, #tpu.memory_space<vmem>>, vector<128x4xf32>,
    %17 = vector.extract_strided_slice %4 {offsets = [1, 1, 0], sizes = [8, 16, 4], strides = [1, 1, 1]} : vector<10x18x4xf32> to vector<8x16x4xf32>
    %18 = vector.shape_cast %17 : vector<8x16x4xf32> to vector<128x4xf32>
    %c0_12 = arith.constant 0 : index
    %c16 = arith.constant 16 : index
    %19 = vector.load %arg7[%c0_12, %c16] : memref<128x36xf32, #tpu.memory_space<vmem>>, vector<128x4xf32>
    tpu.vector_store %arg7[%c0_12, %c16], %18 {strides = array<i32>} : memref<128x36xf32, #tpu.memory_space<vmem>>, vector<128x4xf32>,
    %20 = vector.extract_strided_slice %4 {offsets = [1, 2, 0], sizes = [8, 16, 4], strides = [1, 1, 1]} : vector<10x18x4xf32> to vector<8x16x4xf32>
    %21 = vector.shape_cast %20 : vector<8x16x4xf32> to vector<128x4xf32>
    %c0_13 = arith.constant 0 : index
    %c20 = arith.constant 20 : index
    %22 = vector.load %arg7[%c0_13, %c20] : memref<128x36xf32, #tpu.memory_space<vmem>>, vector<128x4xf32>
    tpu.vector_store %arg7[%c0_13, %c20], %21 {strides = array<i32>} : memref<128x36xf32, #tpu.memory_space<vmem>>, vector<128x4xf32>,
    %23 = vector.extract_strided_slice %4 {offsets = [2, 0, 0], sizes = [8, 16, 4], strides = [1, 1, 1]} : vector<10x18x4xf32> to vector<8x16x4xf32>
    %24 = vector.shape_cast %23 : vector<8x16x4xf32> to vector<128x4xf32>
    %c0_14 = arith.constant 0 : index
    %c24 = arith.constant 24 : index
    %25 = vector.load %arg7[%c0_14, %c24] : memref<128x36xf32, #tpu.memory_space<vmem>>, vector<128x4xf32>
    tpu.vector_store %arg7[%c0_14, %c24], %24 {strides = array<i32>} : memref<128x36xf32, #tpu.memory_space<vmem>>, vector<128x4xf32>,
    %26 = vector.extract_strided_slice %4 {offsets = [2, 1, 0], sizes = [8, 16, 4], strides = [1, 1, 1]} : vector<10x18x4xf32> to vector<8x16x4xf32>
    %27 = vector.shape_cast %26 : vector<8x16x4xf32> to vector<128x4xf32>
    %c0_15 = arith.constant 0 : index
    %c28 = arith.constant 28 : index
    %28 = vector.load %arg7[%c0_15, %c28] : memref<128x36xf32, #tpu.memory_space<vmem>>, vector<128x4xf32>
    tpu.vector_store %arg7[%c0_15, %c28], %27 {strides = array<i32>} : memref<128x36xf32, #tpu.memory_space<vmem>>, vector<128x4xf32>,
    %29 = vector.extract_strided_slice %4 {offsets = [2, 2, 0], sizes = [8, 16, 4], strides = [1, 1, 1]} : vector<10x18x4xf32> to vector<8x16x4xf32>
    %30 = vector.shape_cast %29 : vector<8x16x4xf32> to vector<128x4xf32>
    %c0_16 = arith.constant 0 : index
    %c32 = arith.constant 32 : index
    %31 = vector.load %arg7[%c0_16, %c32] : memref<128x36xf32, #tpu.memory_space<vmem>>, vector<128x4xf32>
    tpu.vector_store %arg7[%c0_16, %c32], %30 {strides = array<i32>} : memref<128x36xf32, #tpu.memory_space<vmem>>, vector<128x4xf32>,
    %c0_17 = arith.constant 0 : index
    %c0_18 = arith.constant 0 : index
    %32 = vector.load %arg7[%c0_17, %c0_18] : memref<128x36xf32, #tpu.memory_space<vmem>>, vector<128x36xf32>
    %c0_19 = arith.constant 0 : index
    %c0_20 = arith.constant 0 : index
    %33 = vector.load %arg5[%c0_19, %c0_20] : memref<1x16xf32, #tpu.memory_space<vmem>>, vector<1x16xf32>
    %34 = vector.shape_cast %33 : vector<1x16xf32> to vector<16xf32>
    %c0_21 = arith.constant 0 : index
    %c0_22 = arith.constant 0 : index
    %c0_23 = arith.constant 0 : index
    %35 = vector.load %arg4[%c0_21, %c0_22, %c0_23] : memref<2x36x16xf32, #tpu.memory_space<vmem>>, vector<1x36x16xf32>
    %36 = vector.shape_cast %35 : vector<1x36x16xf32> to vector<36x16xf32>
    %cst = arith.constant dense<0.000000e+00> : vector<128x16xf32>
    %37 = tpu.matmul %32, %36, %cst {dimension_numbers = #tpu.dot_dimension_numbers<[1], [0], [0], [1], [0, 0, 1, 1], [], []>} : vector<128x36xf32>, vector<36x16xf32>, vector<128x16xf32> -> vector<128x16xf32>
    %38 = vector.shape_cast %34 : vector<16xf32> to vector<1x16xf32>
    %39 = vector.broadcast %38 : vector<1x16xf32> to vector<128x16xf32>
    %40 = arith.addf %37, %39 : vector<128x16xf32>
    %cst_24 = arith.constant 0.000000e+00 : f32
    %41 = vector.broadcast %cst_24 : f32 to vector<128x16xf32>
    %42 = arith.maximumf %40, %41 : vector<128x16xf32>
    %43 = vector.shape_cast %42 : vector<128x16xf32> to vector<8x16x16xf32>
    %c0_25 = arith.constant 0 : index
    %c0_26 = arith.constant 0 : index
    %c0_27 = arith.constant 0 : index
    %c0_28 = arith.constant 0 : index
    %c0_29 = arith.constant 0 : index
    %44 = vector.load %arg6[%c0_25, %c0_26, %c0_27, %c0_28, %c0_29] : memref<1x8x2x16x16xf32, #tpu.memory_space<vmem>>, vector<1x8x1x16x16xf32>
    %45 = vector.shape_cast %44 : vector<1x8x1x16x16xf32> to vector<8x16x16xf32>
    %46 = vector.shape_cast %43 : vector<8x16x16xf32> to vector<1x8x1x16x16xf32>
    tpu.vector_store %arg6[%c0_25, %c0_26, %c0_27, %c0_28, %c0_29], %46 {strides = array<i32>} : memref<1x8x2x16x16xf32, #tpu.memory_space<vmem>>, vector<1x8x1x16x16xf32>,
    %c1 = arith.constant 1 : index
    %c0_30 = arith.constant 0 : index
    %c0_31 = arith.constant 0 : index
    %47 = vector.load %arg4[%c1, %c0_30, %c0_31] : memref<2x36x16xf32, #tpu.memory_space<vmem>>, vector<1x36x16xf32>
    %48 = vector.shape_cast %47 : vector<1x36x16xf32> to vector<36x16xf32>
    %cst_32 = arith.constant dense<0.000000e+00> : vector<128x16xf32>
    %49 = tpu.matmul %32, %48, %cst_32 {dimension_numbers = #tpu.dot_dimension_numbers<[1], [0], [0], [1], [0, 0, 1, 1], [], []>} : vector<128x36xf32>, vector<36x16xf32>, vector<128x16xf32> -> vector<128x16xf32>
    %50 = vector.shape_cast %34 : vector<16xf32> to vector<1x16xf32>
    %51 = vector.broadcast %50 : vector<1x16xf32> to vector<128x16xf32>
    %52 = arith.addf %49, %51 : vector<128x16xf32>
    %cst_33 = arith.constant 0.000000e+00 : f32
    %53 = vector.broadcast %cst_33 : f32 to vector<128x16xf32>
    %54 = arith.maximumf %52, %53 : vector<128x16xf32>
    %55 = vector.shape_cast %54 : vector<128x16xf32> to vector<8x16x16xf32>
    %c0_34 = arith.constant 0 : index
    %c0_35 = arith.constant 0 : index
    %c1_36 = arith.constant 1 : index
    %c0_37 = arith.constant 0 : index
    %c0_38 = arith.constant 0 : index
    %56 = vector.load %arg6[%c0_34, %c0_35, %c1_36, %c0_37, %c0_38] : memref<1x8x2x16x16xf32, #tpu.memory_space<vmem>>, vector<1x8x1x16x16xf32>
    %57 = vector.shape_cast %56 : vector<1x8x1x16x16xf32> to vector<8x16x16xf32>
    %58 = vector.shape_cast %55 : vector<8x16x16xf32> to vector<1x8x1x16x16xf32>
    tpu.vector_store %arg6[%c0_34, %c0_35, %c1_36, %c0_37, %c0_38], %58 {strides = array<i32>} : memref<1x8x2x16x16xf32, #tpu.memory_space<vmem>>, vector<1x8x1x16x16xf32>,
    return
  }
  func.func @transform_0(%arg0: i32, %arg1: i32) -> (i32, i32, i32, i32) {
    %c0_i32 = arith.constant 0 : i32
    %c0_i32_0 = arith.constant 0 : i32
    %c0_i32_1 = arith.constant 0 : i32
    return %arg0, %arg1, %c0_i32, %c0_i32_0 : i32, i32, i32, i32
  }
  func.func @transform_1(%arg0: i32, %arg1: i32) -> (i32, i32, i32, i32) {
    %c1_i32 = arith.constant 1 : i32
    %0 = arith.addi %arg1, %c1_i32 : i32
    %c0_i32 = arith.constant 0 : i32
    %c0_i32_0 = arith.constant 0 : i32
    %c0_i32_1 = arith.constant 0 : i32
    return %arg0, %0, %c0_i32, %c0_i32_0 : i32, i32, i32, i32
  }
  func.func @transform_2(%arg0: i32, %arg1: i32) -> (i32, i32, i32) {
    %c0_i32 = arith.constant 0 : i32
    %c0_i32_0 = arith.constant 0 : i32
    %c0_i32_1 = arith.constant 0 : i32
    %c0_i32_2 = arith.constant 0 : i32
    return %c0_i32, %c0_i32_0, %c0_i32_1 : i32, i32, i32
  }
  func.func @transform_3(%arg0: i32, %arg1: i32) -> (i32, i32) {
    %c0_i32 = arith.constant 0 : i32
    %c0_i32_0 = arith.constant 0 : i32
    %c0_i32_1 = arith.constant 0 : i32
    return %c0_i32, %c0_i32_0 : i32, i32
  }
  func.func @transform_4(%arg0: i32, %arg1: i32) -> (i32, i32, i32, i32, i32) {
    %c0_i32 = arith.constant 0 : i32
    %c0_i32_0 = arith.constant 0 : i32
    %c0_i32_1 = arith.constant 0 : i32
    %c0_i32_2 = arith.constant 0 : i32
    return %arg0, %arg1, %c0_i32, %c0_i32_0, %c0_i32_1 : i32, i32, i32, i32, i32
  }
}

</mosaic_0001>

<llo_original>
// kernel: tpu_custom_call.1
$region0: #{tpu_custom_call.1}
  #allocation0 [shape = 'u32[]', space=smem, size = 0x4, offset = 0x4, fixed_abs, tag = 'smem constant byte address 0x4 - core index']
  #allocation1 [shape = 'u32[144,128]{1,0:T(1,128)}', space=vmem, size = 0x12000, scoped, tag = 'internal scratch']
  #allocation2 [shape = 'f32[128,36]{1,0:T(8,128)}', space=vmem, size = 0x10000, scoped, tag = 'scratch operand']
  %s0 = inlined_call_operand.vmem [shape: f32[2,24,18,4], index: 0, kind: input, shape index: {}]
  %s1 = inlined_call_operand.vmem [shape: f32[2,24,18,4], index: 1, kind: input, shape index: {}]
  %s2 = inlined_call_operand.vmem [shape: f32[2,36,16], index: 2, kind: input, shape index: {}]
  %s3 = inlined_call_operand.vmem [shape: f32[1,16], index: 3, kind: input, shape index: {}]
  %s4 = inlined_call_operand.hbm [shape: f32[2,16,2,16,16], index: 4, kind: output, shape index: {}]
  %s5 = sld [smem:[#allocation0]]
  $region49: #{tpu_custom_call.1} parent=0
    _
  %s7 = ssub.s32 1, %s5
  %s8 = scalar_select 0, %s7, %s5
  $region1: #{tpu_custom_call.1} parent=0
    #allocation3 [shape = 'u8[262144]{0}', space=vmem, size = 0x40000, scoped, tag = 'output window, operand 0']
    #allocation4 [shape = 's32[2]{0}', space=sflag, size = 0x8, scoped, tag = 'scoped memory for tpu_custom_call.1']
    %9 = vsyncpa [#allocation4], 0
    %s10 = scalar_lea.sflag [#allocation4], 1
    %11 = vsyncpa %s10, 0
    loop: start=0, step=1, limit=6
    $region2: #{tpu_custom_call.1} parent=1 // loop_pre_header
      _
    $region3: #{tpu_custom_call.1} parent=1 // loop_header
      %s13 = sphi 0, %s17
      %p14 = scmp.ge.s32.totalorder %s13, 6
      %s20 = sphi 0, %s32
      %s21 = sphi 0, %s28
      %s22 = sphi 0, %s20
      %s23 = sphi 0, %s21
      %s24 = sphi 0, %s22
      %s25 = sphi 0, %s23
      %s37 = sphi 0, %s39
      %s40 = sphi 0, %s37
      %s41 = sphi 0, %s40
      %s57 = sphi 0, %s41
      %s67 = sphi 0, %s69
      %s70 = sphi 0, %s67
      %s71 = sphi 0, %s70
      %s87 = sphi 0, %s71
      %s91 = sphi 0, %s91
      %s93 = sphi 0, %s91
      %s94 = sphi 0, %s93
      %s108 = sphi 0, %s94
      %s112 = sphi 0, %s112
      %s114 = sphi 0, %s112
      %s115 = sphi 0, %s114
      %s129 = sphi 0, %s115
      %s137 = sphi 0, %s139
      %s140 = sphi 0, %s137
      %s141 = sphi 0, %s140
      %s157 = sphi 0, %s141
    $region4: #{tpu_custom_call.1} parent=1 // loop_header_branch
      %16 = sbr.rel (%p14) target = $region8
    $region5: #{tpu_custom_call.1} parent=1 // loop_body
      %s18 = ssub.s32 %s13, 1
      %s19 = ssub.s32 %s13, 2
      %s26 = sadd.s32 1, %s21
      %p27 = scmp.ge.s32.totalorder %s26, 2
      %s28 = scalar_select %p27, 0, %s26
      %s29 = sadd.s32 1, %s20
      %s30 = scalar_select %p27, %s29, %s20
      %p31 = scmp.ge.s32.totalorder %s30, 2
      %s32 = scalar_select %p31, 0, %s30
      %s33 = ssub.s32 %s20, %s32
      %s34 = ssub.s32 %s21, %s28
      %s35 = sor.u32 %s33, %s34
      %p36 = scmp.eq.s32.totalorder %s35, 0
      %s38 = sadd.s32 %s37, 1
      %s39 = scalar_select %p36, %s37, %s38
      %p42 = pneg %p36
      %p43 = scmp.eq.s32.totalorder %s13, 3
      %p44 = por %p42, %p43
      %p45 = scmp.ne.s32.totalorder %s37, %s40
      %p46 = scmp.eq.s32.totalorder %s13, 0
      %p47 = por %p45, %p46
      %p48 = scmp.ne.s32.totalorder %s37, %s40
      %p49 = scmp.eq.s32.totalorder %s18, 3
      %p50 = por %p48, %p49
      %p51 = scmp.ne.s32.totalorder %s40, %s41
      %p52 = scmp.eq.s32.totalorder %s18, 0
      %p53 = por %p51, %p52
      %p54 = scmp.ne.s32.totalorder %s40, %s41
      %p55 = scmp.eq.s32.totalorder %s19, 3
      %p56 = por %p54, %p55
      %p58 = scmp.ne.s32.totalorder %s41, %s57
      %p59 = scmp.eq.s32.totalorder %s19, 0
      %p60 = por %p58, %p59
      %s61 = sadd.s32 %s21, 1
      %s62 = sadd.s32 %s28, 1
      %s63 = ssub.s32 %s20, %s32
      %s64 = ssub.s32 %s61, %s62
      %s65 = sor.u32 %s63, %s64
      %p66 = scmp.eq.s32.totalorder %s65, 0
      %s68 = sadd.s32 %s67, 1
      %s69 = scalar_select %p66, %s67, %s68
      %p72 = pneg %p66
      %p73 = scmp.eq.s32.totalorder %s13, 3
      %p74 = por %p72, %p73
      %p75 = scmp.ne.s32.totalorder %s67, %s70
      %p76 = scmp.eq.s32.totalorder %s13, 0
      %p77 = por %p75, %p76
      %p78 = scmp.ne.s32.totalorder %s67, %s70
      %p79 = scmp.eq.s32.totalorder %s18, 3
      %p80 = por %p78, %p79
      %p81 = scmp.ne.s32.totalorder %s70, %s71
      %p82 = scmp.eq.s32.totalorder %s18, 0
      %p83 = por %p81, %p82
      %p84 = scmp.ne.s32.totalorder %s70, %s71
      %p85 = scmp.eq.s32.totalorder %s19, 3
      %p86 = por %p84, %p85
      %p88 = scmp.ne.s32.totalorder %s71, %s87
      %p89 = scmp.eq.s32.totalorder %s19, 0
      %p90 = por %p88, %p89
      %s92 = sadd.s32 %s91, 1
      %p95 = scmp.eq.s32.totalorder %s13, 3
      %p96 = scmp.ne.s32.totalorder %s91, %s93
      %p97 = scmp.eq.s32.totalorder %s13, 0
      %p98 = por %p96, %p97
      %p99 = scmp.ne.s32.totalorder %s91, %s93
      %p100 = scmp.eq.s32.totalorder %s18, 3
      %p101 = por %p99, %p100
      %p102 = scmp.ne.s32.totalorder %s93, %s94
      %p103 = scmp.eq.s32.totalorder %s18, 0
      %p104 = por %p102, %p103
      %p105 = scmp.ne.s32.totalorder %s93, %s94
      %p106 = scmp.eq.s32.totalorder %s19, 3
      %p107 = por %p105, %p106
      %p109 = scmp.ne.s32.totalorder %s94, %s108
      %p110 = scmp.eq.s32.totalorder %s19, 0
      %p111 = por %p109, %p110
      %s113 = sadd.s32 %s112, 1
      %p116 = scmp.eq.s32.totalorder %s13, 3
      %p117 = scmp.ne.s32.totalorder %s112, %s114
      %p118 = scmp.eq.s32.totalorder %s13, 0
      %p119 = por %p117, %p118
      %p120 = scmp.ne.s32.totalorder %s112, %s114
      %p121 = scmp.eq.s32.totalorder %s18, 3
      %p122 = por %p120, %p121
      %p123 = scmp.ne.s32.totalorder %s114, %s115
      %p124 = scmp.eq.s32.totalorder %s18, 0
      %p125 = por %p123, %p124
      %p126 = scmp.ne.s32.totalorder %s114, %s115
      %p127 = scmp.eq.s32.totalorder %s19, 3
      %p128 = por %p126, %p127
      %p130 = scmp.ne.s32.totalorder %s115, %s129
      %p131 = scmp.eq.s32.totalorder %s19, 0
      %p132 = por %p130, %p131
      %s133 = ssub.s32 %s20, %s32
      %s134 = ssub.s32 %s21, %s28
      %s135 = sor.u32 %s133, %s134
      %p136 = scmp.eq.s32.totalorder %s135, 0
      %s138 = sadd.s32 %s137, 1
      %s139 = scalar_select %p136, %s137, %s138
      %p142 = pneg %p136
      %p143 = scmp.eq.s32.totalorder %s13, 3
      %p144 = por %p142, %p143
      %p145 = scmp.ne.s32.totalorder %s137, %s140
      %p146 = scmp.eq.s32.totalorder %s13, 0
      %p147 = por %p145, %p146
      %p148 = scmp.ne.s32.totalorder %s137, %s140
      %p149 = scmp.eq.s32.totalorder %s18, 3
      %p150 = por %p148, %p149
      %p151 = scmp.ne.s32.totalorder %s140, %s141
      %p152 = scmp.eq.s32.totalorder %s18, 0
      %p153 = por %p151, %p152
      %p154 = scmp.ne.s32.totalorder %s140, %s141
      %p155 = scmp.eq.s32.totalorder %s19, 3
      %p156 = por %p154, %p155
      %p158 = scmp.ne.s32.totalorder %s141, %s157
      %p159 = scmp.eq.s32.totalorder %s19, 0
      %p160 = por %p158, %p159
      %p161 = scmp.le.s32.totalorder 1, %s13
      %p162 = scmp.lt.s32.totalorder %s13, 5
      %p163 = pnand %p161, %p162
      %p164 = pneg %p163
      // Predicated region
      $region9: #{tpu_custom_call.1} parent=5 // pred_check
        _
      $region10: #{tpu_custom_call.1} parent=5 // pred_check_branch
        %166 = sbr.rel (%p163) target = $region12
      $region11: #{tpu_custom_call.1} parent=5 // pred_region
        %s167 = ssub.s32 %s13, 1
        // Predicated region
        $region13: #{tpu_custom_call.1} parent=11 // pred_check
          %p168 = pneg %p104
        $region14: #{tpu_custom_call.1} parent=11 // pred_check_branch
          %170 = sbr.rel (%p168) target = $region16
        $region15: #{tpu_custom_call.1} parent=11 // pred_region
          _
        $region16: #{tpu_custom_call.1} parent=11 // pred_fallthru
          _
        // Predicated region
        $region17: #{tpu_custom_call.1} parent=11 // pred_check
          %p171 = pneg %p125
        $region18: #{tpu_custom_call.1} parent=11 // pred_check_branch
          %173 = sbr.rel (%p171) target = $region20
        $region19: #{tpu_custom_call.1} parent=11 // pred_region
          _
        $region20: #{tpu_custom_call.1} parent=11 // pred_fallthru
          _
      $region12: #{tpu_custom_call.1} parent=5 // pred_fallthru
        _
      %p174 = scmp.lt.s32.totalorder %s13, 4
      // Predicated region
      $region21: #{tpu_custom_call.1} parent=5 // pred_check
        %p175 = pneg %p174
      $region22: #{tpu_custom_call.1} parent=5 // pred_check_branch
        %177 = sbr.rel (%p175) target = $region24
      $region23: #{tpu_custom_call.1} parent=5 // pred_region
        // Predicated region
        $region25: #{tpu_custom_call.1} parent=23 // pred_check
          %p178 = pneg %p47
        $region26: #{tpu_custom_call.1} parent=23 // pred_check_branch
          %180 = sbr.rel (%p178) target = $region28
        $region27: #{tpu_custom_call.1} parent=23 // pred_region
          %s181 = smul.u32 8, %s21
          %p182 = scmp.lt.s32.totalorder %s20, 1
          %s183 = scalar_select %p182, %s20, 1
          %p184 = scmp.lt.s32.totalorder %s181, 23
          %s185 = scalar_select %p184, %s181, 23
          %s186 = smul.addr %s185, 3
          %s187 = smul.addr %s183, 72
          %s188 = sadd.s32 %s186, %s187
          %s189 = smul.addr %s188, 8
          %s190 = scalar_lea.vmem %s0, %s189
          %s191 = smul.u32 8, %s21
        $region28: #{tpu_custom_call.1} parent=23 // pred_fallthru
          _
        // Predicated region
        $region29: #{tpu_custom_call.1} parent=23 // pred_check
          %p192 = pneg %p77
        $region30: #{tpu_custom_call.1} parent=23 // pred_check_branch
          %194 = sbr.rel (%p192) target = $region32
        $region31: #{tpu_custom_call.1} parent=23 // pred_region
          %s195 = sadd.s32 %s21, 1
          %s196 = smul.u32 8, %s195
          %p197 = scmp.lt.s32.totalorder %s20, 1
          %s198 = scalar_select %p197, %s20, 1
          %p199 = scmp.lt.s32.totalorder %s196, 23
          %s200 = scalar_select %p199, %s196, 23
          %s201 = smul.addr %s200, 3
          %s202 = smul.addr %s198, 72
          %s203 = sadd.s32 %s201, %s202
          %s204 = smul.addr %s203, 8
          %s205 = scalar_lea.vmem %s1, %s204
          %s206 = sadd.s32 %s21, 1
          %s207 = smul.u32 8, %s206
        $region32: #{tpu_custom_call.1} parent=23 // pred_fallthru
          _
      $region24: #{tpu_custom_call.1} parent=5 // pred_fallthru
        _
      %p208 = scmp.le.s32.totalorder 1, %s13
      %p209 = scmp.lt.s32.totalorder %s13, 5
      %p210 = pnand %p208, %p209
      %p211 = pneg %p210
      // Predicated region
      $region33: #{tpu_custom_call.1} parent=5 // pred_check
        _
      $region34: #{tpu_custom_call.1} parent=5 // pred_check_branch
        %213 = sbr.rel (%p210) target = $region36
      $region35: #{tpu_custom_call.1} parent=5 // pred_region
        %s214 = ssub.s32 %s13, 1
        %s215 = smul.u32 8, %s23
        %p216 = scmp.lt.s32.totalorder %s22, 1
        %s217 = scalar_select %p216, %s22, 1
        %p218 = scmp.lt.s32.totalorder %s215, 23
        %s219 = scalar_select %p218, %s215, 23
        %s220 = smul.addr %s219, 3
        %s221 = smul.addr %s217, 72
        %s222 = sadd.s32 %s220, %s221
        %s223 = smul.addr %s222, 8
        %s224 = scalar_lea.vmem %s0, %s223
        %p225 = pneg %p53
        %p226 = pneg %p50
        %s227 = sadd.s32 %s23, 1
        %s228 = smul.u32 8, %s227
        %p229 = scmp.lt.s32.totalorder %s22, 1
        %s230 = scalar_select %p229, %s22, 1
        %p231 = scmp.lt.s32.totalorder %s228, 23
        %s232 = scalar_select %p231, %s228, 23
        %s233 = smul.addr %s232, 3
        %s234 = smul.addr %s230, 72
        %s235 = sadd.s32 %s233, %s234
        %s236 = smul.addr %s235, 8
        %s237 = scalar_lea.vmem %s1, %s236
        %p238 = pneg %p83
        %p239 = pneg %p80
        %p240 = pneg %p104
        %p241 = pneg %p101
        %p242 = pneg %p125
        %p243 = pneg %p122
        %p244 = pneg %p153
        %p245 = pneg %p150
        %s246 = sand.u32 %s140, 1
        %s247 = scalar_lea.sflag [#allocation4], %s246
        %s248 = sand.u32 %s140, 1
        %s249 = smul.addr %s248, 256
        %s250 = scalar_lea.vmem [#allocation3], %s249
        %s251 = smul.u32 8, %s23
        %p252 = scmp.lt.s32.totalorder %s22, 1
        %s253 = scalar_select %p252, %s22, 1
        %p254 = scmp.lt.s32.totalorder %s251, 23
        %s255 = scalar_select %p254, %s251, 23
        %s256 = smul.addr %s255, 3
        %s257 = smul.addr %s253, 72
        %s258 = sadd.s32 %s256, %s257
        %s259 = smul.addr %s258, 8
        %s260 = scalar_lea.vmem %s0, %s259
        %s261 = smul.u32 8, %s23
        %s262 = sadd.s32 %s23, 1
        %s263 = smul.u32 8, %s262
        %p264 = scmp.lt.s32.totalorder %s22, 1
        %s265 = scalar_select %p264, %s22, 1
        %p266 = scmp.lt.s32.totalorder %s263, 23
        %s267 = scalar_select %p266, %s263, 23
        %s268 = smul.addr %s267, 3
        %s269 = smul.addr %s265, 72
        %s270 = sadd.s32 %s268, %s269
        %s271 = smul.addr %s270, 8
        %s272 = scalar_lea.vmem %s1, %s271
        %s273 = sadd.s32 %s23, 1
        %s274 = smul.u32 8, %s273
        %s275 = smul.u32 8, %s23
        %v276 = vld [vmem:[%s260] sm:$0xff]
        %v277 = vld [vmem:[%s260 + $0x8] sm:$0xff]
        %v278 = vld [vmem:[%s260 + $0x10] sm:$0x3]
        %v279 = vld [vmem:[%s260 + $0x18] sm:$0xff]
        %v280 = vld [vmem:[%s260 + $0x20] sm:$0xff]
        %v281 = vld [vmem:[%s260 + $0x28] sm:$0x3]
        %v282 = vld [vmem:[%s260 + $0x30] sm:$0xff]
        %v283 = vld [vmem:[%s260 + $0x38] sm:$0xff]
        %v284 = vld [vmem:[%s260 + $0x40] sm:$0x3]
        %v285 = vld [vmem:[%s260 + $0x48] sm:$0xff]
        %v286 = vld [vmem:[%s260 + $0x50] sm:$0xff]
        %v287 = vld [vmem:[%s260 + $0x58] sm:$0x3]
        %v288 = vld [vmem:[%s260 + $0x60] sm:$0xff]
        %v289 = vld [vmem:[%s260 + $0x68] sm:$0xff]
        %v290 = vld [vmem:[%s260 + $0x70] sm:$0x3]
        %v291 = vld [vmem:[%s260 + $0x78] sm:$0xff]
        %v292 = vld [vmem:[%s260 + $0x80] sm:$0xff]
        %v293 = vld [vmem:[%s260 + $0x88] sm:$0x3]
        %v294 = vld [vmem:[%s260 + $0x90] sm:$0xff]
        %v295 = vld [vmem:[%s260 + $0x98] sm:$0xff]
        %v296 = vld [vmem:[%s260 + $0xa0] sm:$0x3]
        %v297 = vld [vmem:[%s260 + $0xa8] sm:$0xff]
        %v298 = vld [vmem:[%s260 + $0xb0] sm:$0xff]
        %v299 = vld [vmem:[%s260 + $0xb8] sm:$0x3]
        %v300 = vld [vmem:[%s272] sm:$0xff]
        %v301 = vld [vmem:[%s272 + $0x8] sm:$0xff]
        %v302 = vld [vmem:[%s272 + $0x10] sm:$0x3]
        %v303 = vld [vmem:[%s272 + $0x18] sm:$0xff]
        %v304 = vld [vmem:[%s272 + $0x20] sm:$0xff]
        %v305 = vld [vmem:[%s272 + $0x28] sm:$0x3]
        %vm306 = vcmask 31744
        %307 = vst.msk [vmem:[#allocation2] sm:$0xff] %vm306, %v276
        %308 = vst.msk [vmem:[#allocation2 + $0x8] sm:$0xff] %vm306, %v277
        %309 = vst.msk [vmem:[#allocation2 + $0x10] sm:$0xff] %vm306, %v279
        %310 = vst.msk [vmem:[#allocation2 + $0x18] sm:$0xff] %vm306, %v280
        %311 = vst.msk [vmem:[#allocation2 + $0x20] sm:$0xff] %vm306, %v282
        %312 = vst.msk [vmem:[#allocation2 + $0x28] sm:$0xff] %vm306, %v283
        %313 = vst.msk [vmem:[#allocation2 + $0x30] sm:$0xff] %vm306, %v285
        %314 = vst.msk [vmem:[#allocation2 + $0x38] sm:$0xff] %vm306, %v286
        %315 = vst.msk [vmem:[#allocation2 + $0x40] sm:$0xff] %vm306, %v288
        %316 = vst.msk [vmem:[#allocation2 + $0x48] sm:$0xff] %vm306, %v289
        %317 = vst.msk [vmem:[#allocation2 + $0x50] sm:$0xff] %vm306, %v291
        %318 = vst.msk [vmem:[#allocation2 + $0x58] sm:$0xff] %vm306, %v292
        %319 = vst.msk [vmem:[#allocation2 + $0x60] sm:$0xff] %vm306, %v294
        %320 = vst.msk [vmem:[#allocation2 + $0x68] sm:$0xff] %vm306, %v295
        %321 = vst.msk [vmem:[#allocation2 + $0x70] sm:$0xff] %vm306, %v297
        %322 = vst.msk [vmem:[#allocation2 + $0x78] sm:$0xff] %vm306, %v298
        %vm347 = vcmask 1046528
        %v348 = vrot.slane %v276, 1
        %v349 = vrot.slane %v277, 1
        %v350 = vsel %vm347, %v348, %v349
        %v351 = vrot.slane %v278, 1
        %v352 = vsel %vm347, %v349, %v351
        %v353 = vrot.slane %v279, 1
        %v354 = vrot.slane %v280, 1
        %v355 = vsel %vm347, %v353, %v354
        %v356 = vrot.slane %v281, 1
        %v357 = vsel %vm347, %v354, %v356
        %v358 = vrot.slane %v282, 1
        %v359 = vrot.slane %v283, 1
        %v360 = vsel %vm347, %v358, %v359
        %v361 = vrot.slane %v284, 1
        %v362 = vsel %vm347, %v359, %v361
        %v363 = vrot.slane %v285, 1
        %v364 = vrot.slane %v286, 1
        %v365 = vsel %vm347, %v363, %v364
        %v366 = vrot.slane %v287, 1
        %v367 = vsel %vm347, %v364, %v366
        %v368 = vrot.slane %v288, 1
        %v369 = vrot.slane %v289, 1
        %v370 = vsel %vm347, %v368, %v369
        %v371 = vrot.slane %v290, 1
        %v372 = vsel %vm347, %v369, %v371
        %v373 = vrot.slane %v291, 1
        %v374 = vrot.slane %v292, 1
        %v375 = vsel %vm347, %v373, %v374
        %v376 = vrot.slane %v293, 1
        %v377 = vsel %vm347, %v374, %v376
        %v378 = vrot.slane %v294, 1
        %v379 = vrot.slane %v295, 1
        %v380 = vsel %vm347, %v378, %v379
        %v381 = vrot.slane %v296, 1
        %v382 = vsel %vm347, %v379, %v381
        %v383 = vrot.slane %v297, 1
        %v384 = vrot.slane %v298, 1
        %v385 = vsel %vm347, %v383, %v384
        %v386 = vrot.slane %v299, 1
        %v387 = vsel %vm347, %v384, %v386
        %388 = vrot.lane.b32.xlu0 %v350, 4
        %v389 = vpop.permute.xlu0 %388
        %390 = vrot.lane.b32.xlu0 %v352, 4
        %v391 = vpop.permute.xlu0 %390
        %392 = vrot.lane.b32.xlu0 %v355, 4
        %v393 = vpop.permute.xlu0 %392
        %394 = vrot.lane.b32.xlu0 %v357, 4
        %v395 = vpop.permute.xlu0 %394
        %396 = vrot.lane.b32.xlu0 %v360, 4
        %v397 = vpop.permute.xlu0 %396
        %398 = vrot.lane.b32.xlu0 %v362, 4
        %v399 = vpop.permute.xlu0 %398
        %400 = vrot.lane.b32.xlu0 %v365, 4
        %v401 = vpop.permute.xlu0 %400
        %402 = vrot.lane.b32.xlu0 %v367, 4
        %v403 = vpop.permute.xlu0 %402
        %404 = vrot.lane.b32.xlu0 %v370, 4
        %v405 = vpop.permute.xlu0 %404
        %406 = vrot.lane.b32.xlu0 %v372, 4
        %v407 = vpop.permute.xlu0 %406
        %408 = vrot.lane.b32.xlu0 %v375, 4
        %v409 = vpop.permute.xlu0 %408
        %410 = vrot.lane.b32.xlu0 %v377, 4
        %v411 = vpop.permute.xlu0 %410
        %412 = vrot.lane.b32.xlu0 %v380, 4
        %v413 = vpop.permute.xlu0 %412
        %414 = vrot.lane.b32.xlu0 %v382, 4
        %v415 = vpop.permute.xlu0 %414
        %416 = vrot.lane.b32.xlu0 %v385, 4
        %v417 = vpop.permute.xlu0 %416
        %418 = vrot.lane.b32.xlu0 %v387, 4
        %v419 = vpop.permute.xlu0 %418
        %vm436 = vcmask 64544
        %437 = vst.msk [vmem:[#allocation2] sm:$0xff] %vm436, %v389
        %438 = vst.msk [vmem:[#allocation2 + $0x8] sm:$0xff] %vm436, %v391
        %439 = vst.msk [vmem:[#allocation2 + $0x10] sm:$0xff] %vm436, %v393
        %440 = vst.msk [vmem:[#allocation2 + $0x18] sm:$0xff] %vm436, %v395
        %441 = vst.msk [vmem:[#allocation2 + $0x20] sm:$0xff] %vm436, %v397
        %442 = vst.msk [vmem:[#allocation2 + $0x28] sm:$0xff] %vm436, %v399
        %443 = vst.msk [vmem:[#allocation2 + $0x30] sm:$0xff] %vm436, %v401
        %444 = vst.msk [vmem:[#allocation2 + $0x38] sm:$0xff] %vm436, %v403
        %445 = vst.msk [vmem:[#allocation2 + $0x40] sm:$0xff] %vm436, %v405
        %446 = vst.msk [vmem:[#allocation2 + $0x48] sm:$0xff] %vm436, %v407
        %447 = vst.msk [vmem:[#allocation2 + $0x50] sm:$0xff] %vm436, %v409
        %448 = vst.msk [vmem:[#allocation2 + $0x58] sm:$0xff] %vm436, %v411
        %449 = vst.msk [vmem:[#allocation2 + $0x60] sm:$0xff] %vm436, %v413
        %450 = vst.msk [vmem:[#allocation2 + $0x68] sm:$0xff] %vm436, %v415
        %451 = vst.msk [vmem:[#allocation2 + $0x70] sm:$0xff] %vm436, %v417
        %452 = vst.msk [vmem:[#allocation2 + $0x78] sm:$0xff] %vm436, %v419
        %vm453 = vcmask 1045504
        %v454 = vrot.slane %v276, 2
        %v455 = vrot.slane %v277, 2
        %v456 = vsel %vm453, %v454, %v455
        %v457 = vrot.slane %v278, 2
        %v458 = vsel %vm453, %v455, %v457
        %v459 = vrot.slane %v279, 2
        %v460 = vrot.slane %v280, 2
        %v461 = vsel %vm453, %v459, %v460
        %v462 = vrot.slane %v281, 2
        %v463 = vsel %vm453, %v460, %v462
        %v464 = vrot.slane %v282, 2
        %v465 = vrot.slane %v283, 2
        %v466 = vsel %vm453, %v464, %v465
        %v467 = vrot.slane %v284, 2
        %v468 = vsel %vm453, %v465, %v467
        %v469 = vrot.slane %v285, 2
        %v470 = vrot.slane %v286, 2
        %v471 = vsel %vm453, %v469, %v470
        %v472 = vrot.slane %v287, 2
        %v473 = vsel %vm453, %v470, %v472
        %v474 = vrot.slane %v288, 2
        %v475 = vrot.slane %v289, 2
        %v476 = vsel %vm453, %v474, %v475
        %v477 = vrot.slane %v290, 2
        %v478 = vsel %vm453, %v475, %v477
        %v479 = vrot.slane %v291, 2
        %v480 = vrot.slane %v292, 2
        %v481 = vsel %vm453, %v479, %v480
        %v482 = vrot.slane %v293, 2
        %v483 = vsel %vm453, %v480, %v482
        %v484 = vrot.slane %v294, 2
        %v485 = vrot.slane %v295, 2
        %v486 = vsel %vm453, %v484, %v485
        %v487 = vrot.slane %v296, 2
        %v488 = vsel %vm453, %v485, %v487
        %v489 = vrot.slane %v297, 2
        %v490 = vrot.slane %v298, 2
        %v491 = vsel %vm453, %v489, %v490
        %v492 = vrot.slane %v299, 2
        %v493 = vsel %vm453, %v490, %v492
        %494 = vrot.lane.b32.xlu0 %v456, 8
        %v495 = vpop.permute.xlu0 %494
        %496 = vrot.lane.b32.xlu0 %v458, 8
        %v497 = vpop.permute.xlu0 %496
        %498 = vrot.lane.b32.xlu0 %v461, 8
        %v499 = vpop.permute.xlu0 %498
        %500 = vrot.lane.b32.xlu0 %v463, 8
        %v501 = vpop.permute.xlu0 %500
        %502 = vrot.lane.b32.xlu0 %v466, 8
        %v503 = vpop.permute.xlu0 %502
        %504 = vrot.lane.b32.xlu0 %v468, 8
        %v505 = vpop.permute.xlu0 %504
        %506 = vrot.lane.b32.xlu0 %v471, 8
        %v507 = vpop.permute.xlu0 %506
        %508 = vrot.lane.b32.xlu0 %v473, 8
        %v509 = vpop.permute.xlu0 %508
        %510 = vrot.lane.b32.xlu0 %v476, 8
        %v511 = vpop.permute.xlu0 %510
        %512 = vrot.lane.b32.xlu0 %v478, 8
        %v513 = vpop.permute.xlu0 %512
        %514 = vrot.lane.b32.xlu0 %v481, 8
        %v515 = vpop.permute.xlu0 %514
        %516 = vrot.lane.b32.xlu0 %v483, 8
        %v517 = vpop.permute.xlu0 %516
        %518 = vrot.lane.b32.xlu0 %v486, 8
        %v519 = vpop.permute.xlu0 %518
        %520 = vrot.lane.b32.xlu0 %v488, 8
        %v521 = vpop.permute.xlu0 %520
        %522 = vrot.lane.b32.xlu0 %v491, 8
        %v523 = vpop.permute.xlu0 %522
        %524 = vrot.lane.b32.xlu0 %v493, 8
        %v525 = vpop.permute.xlu0 %524
        %vm542 = vcmask 97344
        %543 = vst.msk [vmem:[#allocation2] sm:$0xff] %vm542, %v495
        %544 = vst.msk [vmem:[#allocation2 + $0x8] sm:$0xff] %vm542, %v497
        %545 = vst.msk [vmem:[#allocation2 + $0x10] sm:$0xff] %vm542, %v499
        %546 = vst.msk [vmem:[#allocation2 + $0x18] sm:$0xff] %vm542, %v501
        %547 = vst.msk [vmem:[#allocation2 + $0x20] sm:$0xff] %vm542, %v503
        %548 = vst.msk [vmem:[#allocation2 + $0x28] sm:$0xff] %vm542, %v505
        %549 = vst.msk [vmem:[#allocation2 + $0x30] sm:$0xff] %vm542, %v507
        %550 = vst.msk [vmem:[#allocation2 + $0x38] sm:$0xff] %vm542, %v509
        %551 = vst.msk [vmem:[#allocation2 + $0x40] sm:$0xff] %vm542, %v511
        %552 = vst.msk [vmem:[#allocation2 + $0x48] sm:$0xff] %vm542, %v513
        %553 = vst.msk [vmem:[#allocation2 + $0x50] sm:$0xff] %vm542, %v515
        %554 = vst.msk [vmem:[#allocation2 + $0x58] sm:$0xff] %vm542, %v517
        %555 = vst.msk [vmem:[#allocation2 + $0x60] sm:$0xff] %vm542, %v519
        %556 = vst.msk [vmem:[#allocation2 + $0x68] sm:$0xff] %vm542, %v521
        %557 = vst.msk [vmem:[#allocation2 + $0x70] sm:$0xff] %vm542, %v523
        %558 = vst.msk [vmem:[#allocation2 + $0x78] sm:$0xff] %vm542, %v525
        %561 = vrot.lane.b32.xlu0 %v279, 12
        %v562 = vpop.permute.xlu0 %561
        %563 = vrot.lane.b32.xlu0 %v280, 12
        %v564 = vpop.permute.xlu0 %563
        %565 = vrot.lane.b32.xlu0 %v282, 12
        %v566 = vpop.permute.xlu0 %565
        %567 = vrot.lane.b32.xlu0 %v283, 12
        %v568 = vpop.permute.xlu0 %567
        %569 = vrot.lane.b32.xlu0 %v285, 12
        %v570 = vpop.permute.xlu0 %569
        %571 = vrot.lane.b32.xlu0 %v286, 12
        %v572 = vpop.permute.xlu0 %571
        %573 = vrot.lane.b32.xlu0 %v288, 12
        %v574 = vpop.permute.xlu0 %573
        %575 = vrot.lane.b32.xlu0 %v289, 12
        %v576 = vpop.permute.xlu0 %575
        %577 = vrot.lane.b32.xlu0 %v291, 12
        %v578 = vpop.permute.xlu0 %577
        %579 = vrot.lane.b32.xlu0 %v292, 12
        %v580 = vpop.permute.xlu0 %579
        %581 = vrot.lane.b32.xlu0 %v294, 12
        %v582 = vpop.permute.xlu0 %581
        %583 = vrot.lane.b32.xlu0 %v295, 12
        %v584 = vpop.permute.xlu0 %583
        %585 = vrot.lane.b32.xlu0 %v297, 12
        %v586 = vpop.permute.xlu0 %585
        %587 = vrot.lane.b32.xlu0 %v298, 12
        %v588 = vpop.permute.xlu0 %587
        %589 = vrot.lane.b32.xlu0 %v300, 12
        %v590 = vpop.permute.xlu0 %589
        %591 = vrot.lane.b32.xlu0 %v301, 12
        %v592 = vpop.permute.xlu0 %591
        %vm609 = vcmask 130144
        %610 = vst.msk [vmem:[#allocation2] sm:$0xff] %vm609, %v562
        %611 = vst.msk [vmem:[#allocation2 + $0x8] sm:$0xff] %vm609, %v564
        %612 = vst.msk [vmem:[#allocation2 + $0x10] sm:$0xff] %vm609, %v566
        %613 = vst.msk [vmem:[#allocation2 + $0x18] sm:$0xff] %vm609, %v568
        %614 = vst.msk [vmem:[#allocation2 + $0x20] sm:$0xff] %vm609, %v570
        %615 = vst.msk [vmem:[#allocation2 + $0x28] sm:$0xff] %vm609, %v572
        %616 = vst.msk [vmem:[#allocation2 + $0x30] sm:$0xff] %vm609, %v574
        %617 = vst.msk [vmem:[#allocation2 + $0x38] sm:$0xff] %vm609, %v576
        %618 = vst.msk [vmem:[#allocation2 + $0x40] sm:$0xff] %vm609, %v578
        %619 = vst.msk [vmem:[#allocation2 + $0x48] sm:$0xff] %vm609, %v580
        %620 = vst.msk [vmem:[#allocation2 + $0x50] sm:$0xff] %vm609, %v582
        %621 = vst.msk [vmem:[#allocation2 + $0x58] sm:$0xff] %vm609, %v584
        %622 = vst.msk [vmem:[#allocation2 + $0x60] sm:$0xff] %vm609, %v586
        %623 = vst.msk [vmem:[#allocation2 + $0x68] sm:$0xff] %vm609, %v588
        %624 = vst.msk [vmem:[#allocation2 + $0x70] sm:$0xff] %vm609, %v590
        %625 = vst.msk [vmem:[#allocation2 + $0x78] sm:$0xff] %vm609, %v592
        %v627 = vrot.slane %v300, 1
        %v628 = vrot.slane %v301, 1
        %v629 = vsel %vm347, %v627, %v628
        %v630 = vrot.slane %v302, 1
        %v631 = vsel %vm347, %v628, %v630
        %632 = vrot.lane.b32.xlu0 %v355, 16
        %v633 = vpop.permute.xlu0 %632
        %634 = vrot.lane.b32.xlu0 %v357, 16
        %v635 = vpop.permute.xlu0 %634
        %636 = vrot.lane.b32.xlu0 %v360, 16
        %v637 = vpop.permute.xlu0 %636
        %638 = vrot.lane.b32.xlu0 %v362, 16
        %v639 = vpop.permute.xlu0 %638
        %640 = vrot.lane.b32.xlu0 %v365, 16
        %v641 = vpop.permute.xlu0 %640
        %642 = vrot.lane.b32.xlu0 %v367, 16
        %v643 = vpop.permute.xlu0 %642
        %644 = vrot.lane.b32.xlu0 %v370, 16
        %v645 = vpop.permute.xlu0 %644
        %646 = vrot.lane.b32.xlu0 %v372, 16
        %v647 = vpop.permute.xlu0 %646
        %648 = vrot.lane.b32.xlu0 %v375, 16
        %v649 = vpop.permute.xlu0 %648
        %650 = vrot.lane.b32.xlu0 %v377, 16
        %v651 = vpop.permute.xlu0 %650
        %652 = vrot.lane.b32.xlu0 %v380, 16
        %v653 = vpop.permute.xlu0 %652
        %654 = vrot.lane.b32.xlu0 %v382, 16
        %v655 = vpop.permute.xlu0 %654
        %656 = vrot.lane.b32.xlu0 %v385, 16
        %v657 = vpop.permute.xlu0 %656
        %658 = vrot.lane.b32.xlu0 %v387, 16
        %v659 = vpop.permute.xlu0 %658
        %660 = vrot.lane.b32.xlu0 %v629, 16
        %v661 = vpop.permute.xlu0 %660
        %662 = vrot.lane.b32.xlu0 %v631, 16
        %v663 = vpop.permute.xlu0 %662
        %vm680 = vcmask 162944
        %681 = vst.msk [vmem:[#allocation2] sm:$0xff] %vm680, %v633
        %682 = vst.msk [vmem:[#allocation2 + $0x8] sm:$0xff] %vm680, %v635
        %683 = vst.msk [vmem:[#allocation2 + $0x10] sm:$0xff] %vm680, %v637
        %684 = vst.msk [vmem:[#allocation2 + $0x18] sm:$0xff] %vm680, %v639
        %685 = vst.msk [vmem:[#allocation2 + $0x20] sm:$0xff] %vm680, %v641
        %686 = vst.msk [vmem:[#allocation2 + $0x28] sm:$0xff] %vm680, %v643
        %687 = vst.msk [vmem:[#allocation2 + $0x30] sm:$0xff] %vm680, %v645
        %688 = vst.msk [vmem:[#allocation2 + $0x38] sm:$0xff] %vm680, %v647
        %689 = vst.msk [vmem:[#allocation2 + $0x40] sm:$0xff] %vm680, %v649
        %690 = vst.msk [vmem:[#allocation2 + $0x48] sm:$0xff] %vm680, %v651
        %691 = vst.msk [vmem:[#allocation2 + $0x50] sm:$0xff] %vm680, %v653
        %692 = vst.msk [vmem:[#allocation2 + $0x58] sm:$0xff] %vm680, %v655
        %693 = vst.msk [vmem:[#allocation2 + $0x60] sm:$0xff] %vm680, %v657
        %694 = vst.msk [vmem:[#allocation2 + $0x68] sm:$0xff] %vm680, %v659
        %695 = vst.msk [vmem:[#allocation2 + $0x70] sm:$0xff] %vm680, %v661
        %696 = vst.msk [vmem:[#allocation2 + $0x78] sm:$0xff] %vm680, %v663
        %v697 = vrot.slane %v300, 2
        %v698 = vrot.slane %v301, 2
        %v699 = vsel %vm453, %v697, %v698
        %v700 = vrot.slane %v302, 2
        %v701 = vsel %vm453, %v698, %v700
        %702 = vrot.lane.b32.xlu0 %v461, 20
        %v703 = vpop.permute.xlu0 %702
        %704 = vrot.lane.b32.xlu0 %v463, 20
        %v705 = vpop.permute.xlu0 %704
        %706 = vrot.lane.b32.xlu0 %v466, 20
        %v707 = vpop.permute.xlu0 %706
        %708 = vrot.lane.b32.xlu0 %v468, 20
        %v709 = vpop.permute.xlu0 %708
        %710 = vrot.lane.b32.xlu0 %v471, 20
        %v711 = vpop.permute.xlu0 %710
        %712 = vrot.lane.b32.xlu0 %v473, 20
        %v713 = vpop.permute.xlu0 %712
        %714 = vrot.lane.b32.xlu0 %v476, 20
        %v715 = vpop.permute.xlu0 %714
        %716 = vrot.lane.b32.xlu0 %v478, 20
        %v717 = vpop.permute.xlu0 %716
        %718 = vrot.lane.b32.xlu0 %v481, 20
        %v719 = vpop.permute.xlu0 %718
        %720 = vrot.lane.b32.xlu0 %v483, 20
        %v721 = vpop.permute.xlu0 %720
        %722 = vrot.lane.b32.xlu0 %v486, 20
        %v723 = vpop.permute.xlu0 %722
        %724 = vrot.lane.b32.xlu0 %v488, 20
        %v725 = vpop.permute.xlu0 %724
        %726 = vrot.lane.b32.xlu0 %v491, 20
        %v727 = vpop.permute.xlu0 %726
        %728 = vrot.lane.b32.xlu0 %v493, 20
        %v729 = vpop.permute.xlu0 %728
        %730 = vrot.lane.b32.xlu0 %v699, 20
        %v731 = vpop.permute.xlu0 %730
        %732 = vrot.lane.b32.xlu0 %v701, 20
        %v733 = vpop.permute.xlu0 %732
        %vm750 = vcmask 195744
        %751 = vst.msk [vmem:[#allocation2] sm:$0xff] %vm750, %v703
        %752 = vst.msk [vmem:[#allocation2 + $0x8] sm:$0xff] %vm750, %v705
        %753 = vst.msk [vmem:[#allocation2 + $0x10] sm:$0xff] %vm750, %v707
        %754 = vst.msk [vmem:[#allocation2 + $0x18] sm:$0xff] %vm750, %v709
        %755 = vst.msk [vmem:[#allocation2 + $0x20] sm:$0xff] %vm750, %v711
        %756 = vst.msk [vmem:[#allocation2 + $0x28] sm:$0xff] %vm750, %v713
        %757 = vst.msk [vmem:[#allocation2 + $0x30] sm:$0xff] %vm750, %v715
        %758 = vst.msk [vmem:[#allocation2 + $0x38] sm:$0xff] %vm750, %v717
        %759 = vst.msk [vmem:[#allocation2 + $0x40] sm:$0xff] %vm750, %v719
        %760 = vst.msk [vmem:[#allocation2 + $0x48] sm:$0xff] %vm750, %v721
        %761 = vst.msk [vmem:[#allocation2 + $0x50] sm:$0xff] %vm750, %v723
        %762 = vst.msk [vmem:[#allocation2 + $0x58] sm:$0xff] %vm750, %v725
        %763 = vst.msk [vmem:[#allocation2 + $0x60] sm:$0xff] %vm750, %v727
        %764 = vst.msk [vmem:[#allocation2 + $0x68] sm:$0xff] %vm750, %v729
        %765 = vst.msk [vmem:[#allocation2 + $0x70] sm:$0xff] %vm750, %v731
        %766 = vst.msk [vmem:[#allocation2 + $0x78] sm:$0xff] %vm750, %v733
        %769 = vrot.lane.b32.xlu0 %v282, 24
        %v770 = vpop.permute.xlu0 %769
        %771 = vrot.lane.b32.xlu0 %v283, 24
        %v772 = vpop.permute.xlu0 %771
        %773 = vrot.lane.b32.xlu0 %v285, 24
        %v774 = vpop.permute.xlu0 %773
        %775 = vrot.lane.b32.xlu0 %v286, 24
        %v776 = vpop.permute.xlu0 %775
        %777 = vrot.lane.b32.xlu0 %v288, 24
        %v778 = vpop.permute.xlu0 %777
        %779 = vrot.lane.b32.xlu0 %v289, 24
        %v780 = vpop.permute.xlu0 %779
        %781 = vrot.lane.b32.xlu0 %v291, 24
        %v782 = vpop.permute.xlu0 %781
        %783 = vrot.lane.b32.xlu0 %v292, 24
        %v784 = vpop.permute.xlu0 %783
        %785 = vrot.lane.b32.xlu0 %v294, 24
        %v786 = vpop.permute.xlu0 %785
        %787 = vrot.lane.b32.xlu0 %v295, 24
        %v788 = vpop.permute.xlu0 %787
        %789 = vrot.lane.b32.xlu0 %v297, 24
        %v790 = vpop.permute.xlu0 %789
        %791 = vrot.lane.b32.xlu0 %v298, 24
        %v792 = vpop.permute.xlu0 %791
        %793 = vrot.lane.b32.xlu0 %v300, 24
        %v794 = vpop.permute.xlu0 %793
        %795 = vrot.lane.b32.xlu0 %v301, 24
        %v796 = vpop.permute.xlu0 %795
        %797 = vrot.lane.b32.xlu0 %v303, 24
        %v798 = vpop.permute.xlu0 %797
        %799 = vrot.lane.b32.xlu0 %v304, 24
        %v800 = vpop.permute.xlu0 %799
        %vm817 = vcmask 228544
        %818 = vst.msk [vmem:[#allocation2] sm:$0xff] %vm817, %v770
        %819 = vst.msk [vmem:[#allocation2 + $0x8] sm:$0xff] %vm817, %v772
        %820 = vst.msk [vmem:[#allocation2 + $0x10] sm:$0xff] %vm817, %v774
        %821 = vst.msk [vmem:[#allocation2 + $0x18] sm:$0xff] %vm817, %v776
        %822 = vst.msk [vmem:[#allocation2 + $0x20] sm:$0xff] %vm817, %v778
        %823 = vst.msk [vmem:[#allocation2 + $0x28] sm:$0xff] %vm817, %v780
        %824 = vst.msk [vmem:[#allocation2 + $0x30] sm:$0xff] %vm817, %v782
        %825 = vst.msk [vmem:[#allocation2 + $0x38] sm:$0xff] %vm817, %v784
        %826 = vst.msk [vmem:[#allocation2 + $0x40] sm:$0xff] %vm817, %v786
        %827 = vst.msk [vmem:[#allocation2 + $0x48] sm:$0xff] %vm817, %v788
        %828 = vst.msk [vmem:[#allocation2 + $0x50] sm:$0xff] %vm817, %v790
        %829 = vst.msk [vmem:[#allocation2 + $0x58] sm:$0xff] %vm817, %v792
        %830 = vst.msk [vmem:[#allocation2 + $0x60] sm:$0xff] %vm817, %v794
        %831 = vst.msk [vmem:[#allocation2 + $0x68] sm:$0xff] %vm817, %v796
        %832 = vst.msk [vmem:[#allocation2 + $0x70] sm:$0xff] %vm817, %v798
        %833 = vst.msk [vmem:[#allocation2 + $0x78] sm:$0xff] %vm817, %v800
        %v835 = vrot.slane %v303, 1
        %v836 = vrot.slane %v304, 1
        %v837 = vsel %vm347, %v835, %v836
        %v838 = vrot.slane %v305, 1
        %v839 = vsel %vm347, %v836, %v838
        %840 = vrot.lane.b32.xlu0 %v360, 28
        %v841 = vpop.permute.xlu0 %840
        %842 = vrot.lane.b32.xlu0 %v362, 28
        %v843 = vpop.permute.xlu0 %842
        %844 = vrot.lane.b32.xlu0 %v365, 28
        %v845 = vpop.permute.xlu0 %844
        %846 = vrot.lane.b32.xlu0 %v367, 28
        %v847 = vpop.permute.xlu0 %846
        %848 = vrot.lane.b32.xlu0 %v370, 28
        %v849 = vpop.permute.xlu0 %848
        %850 = vrot.lane.b32.xlu0 %v372, 28
        %v851 = vpop.permute.xlu0 %850
        %852 = vrot.lane.b32.xlu0 %v375, 28
        %v853 = vpop.permute.xlu0 %852
        %854 = vrot.lane.b32.xlu0 %v377, 28
        %v855 = vpop.permute.xlu0 %854
        %856 = vrot.lane.b32.xlu0 %v380, 28
        %v857 = vpop.permute.xlu0 %856
        %858 = vrot.lane.b32.xlu0 %v382, 28
        %v859 = vpop.permute.xlu0 %858
        %860 = vrot.lane.b32.xlu0 %v385, 28
        %v861 = vpop.permute.xlu0 %860
        %862 = vrot.lane.b32.xlu0 %v387, 28
        %v863 = vpop.permute.xlu0 %862
        %864 = vrot.lane.b32.xlu0 %v629, 28
        %v865 = vpop.permute.xlu0 %864
        %866 = vrot.lane.b32.xlu0 %v631, 28
        %v867 = vpop.permute.xlu0 %866
        %868 = vrot.lane.b32.xlu0 %v837, 28
        %v869 = vpop.permute.xlu0 %868
        %870 = vrot.lane.b32.xlu0 %v839, 28
        %v871 = vpop.permute.xlu0 %870
        %vm888 = vcmask 261344
        %889 = vst.msk [vmem:[#allocation2] sm:$0xff] %vm888, %v841
        %890 = vst.msk [vmem:[#allocation2 + $0x8] sm:$0xff] %vm888, %v843
        %891 = vst.msk [vmem:[#allocation2 + $0x10] sm:$0xff] %vm888, %v845
        %892 = vst.msk [vmem:[#allocation2 + $0x18] sm:$0xff] %vm888, %v847
        %893 = vst.msk [vmem:[#allocation2 + $0x20] sm:$0xff] %vm888, %v849
        %894 = vst.msk [vmem:[#allocation2 + $0x28] sm:$0xff] %vm888, %v851
        %895 = vst.msk [vmem:[#allocation2 + $0x30] sm:$0xff] %vm888, %v853
        %896 = vst.msk [vmem:[#allocation2 + $0x38] sm:$0xff] %vm888, %v855
        %897 = vst.msk [vmem:[#allocation2 + $0x40] sm:$0xff] %vm888, %v857
        %898 = vst.msk [vmem:[#allocation2 + $0x48] sm:$0xff] %vm888, %v859
        %899 = vst.msk [vmem:[#allocation2 + $0x50] sm:$0xff] %vm888, %v861
        %900 = vst.msk [vmem:[#allocation2 + $0x58] sm:$0xff] %vm888, %v863
        %901 = vst.msk [vmem:[#allocation2 + $0x60] sm:$0xff] %vm888, %v865
        %902 = vst.msk [vmem:[#allocation2 + $0x68] sm:$0xff] %vm888, %v867
        %903 = vst.msk [vmem:[#allocation2 + $0x70] sm:$0xff] %vm888, %v869
        %904 = vst.msk [vmem:[#allocation2 + $0x78] sm:$0xff] %vm888, %v871
        %v905 = vrot.slane %v303, 2
        %v906 = vrot.slane %v304, 2
        %v907 = vsel %vm453, %v905, %v906
        %v908 = vrot.slane %v305, 2
        %v909 = vsel %vm453, %v906, %v908
        %910 = vrot.lane.b32.xlu0 %v466, 32
        %v911 = vpop.permute.xlu0 %910
        %912 = vrot.lane.b32.xlu0 %v468, 32
        %v913 = vpop.permute.xlu0 %912
        %914 = vrot.lane.b32.xlu0 %v471, 32
        %v915 = vpop.permute.xlu0 %914
        %916 = vrot.lane.b32.xlu0 %v473, 32
        %v917 = vpop.permute.xlu0 %916
        %918 = vrot.lane.b32.xlu0 %v476, 32
        %v919 = vpop.permute.xlu0 %918
        %920 = vrot.lane.b32.xlu0 %v478, 32
        %v921 = vpop.permute.xlu0 %920
        %922 = vrot.lane.b32.xlu0 %v481, 32
        %v923 = vpop.permute.xlu0 %922
        %924 = vrot.lane.b32.xlu0 %v483, 32
        %v925 = vpop.permute.xlu0 %924
        %926 = vrot.lane.b32.xlu0 %v486, 32
        %v927 = vpop.permute.xlu0 %926
        %928 = vrot.lane.b32.xlu0 %v488, 32
        %v929 = vpop.permute.xlu0 %928
        %930 = vrot.lane.b32.xlu0 %v491, 32
        %v931 = vpop.permute.xlu0 %930
        %932 = vrot.lane.b32.xlu0 %v493, 32
        %v933 = vpop.permute.xlu0 %932
        %934 = vrot.lane.b32.xlu0 %v699, 32
        %v935 = vpop.permute.xlu0 %934
        %936 = vrot.lane.b32.xlu0 %v701, 32
        %v937 = vpop.permute.xlu0 %936
        %938 = vrot.lane.b32.xlu0 %v907, 32
        %v939 = vpop.permute.xlu0 %938
        %940 = vrot.lane.b32.xlu0 %v909, 32
        %v941 = vpop.permute.xlu0 %940
        %vm958 = vcmask 294144
        %959 = vst.msk [vmem:[#allocation2] sm:$0xff] %vm958, %v911
        %960 = vst.msk [vmem:[#allocation2 + $0x8] sm:$0xff] %vm958, %v913
        %961 = vst.msk [vmem:[#allocation2 + $0x10] sm:$0xff] %vm958, %v915
        %962 = vst.msk [vmem:[#allocation2 + $0x18] sm:$0xff] %vm958, %v917
        %963 = vst.msk [vmem:[#allocation2 + $0x20] sm:$0xff] %vm958, %v919
        %964 = vst.msk [vmem:[#allocation2 + $0x28] sm:$0xff] %vm958, %v921
        %965 = vst.msk [vmem:[#allocation2 + $0x30] sm:$0xff] %vm958, %v923
        %966 = vst.msk [vmem:[#allocation2 + $0x38] sm:$0xff] %vm958, %v925
        %967 = vst.msk [vmem:[#allocation2 + $0x40] sm:$0xff] %vm958, %v927
        %968 = vst.msk [vmem:[#allocation2 + $0x48] sm:$0xff] %vm958, %v929
        %969 = vst.msk [vmem:[#allocation2 + $0x50] sm:$0xff] %vm958, %v931
        %970 = vst.msk [vmem:[#allocation2 + $0x58] sm:$0xff] %vm958, %v933
        %971 = vst.msk [vmem:[#allocation2 + $0x60] sm:$0xff] %vm958, %v935
        %972 = vst.msk [vmem:[#allocation2 + $0x68] sm:$0xff] %vm958, %v937
        %973 = vst.msk [vmem:[#allocation2 + $0x70] sm:$0xff] %vm958, %v939
        %974 = vst.msk [vmem:[#allocation2 + $0x78] sm:$0xff] %vm958, %v941
        %v975 = vld [vmem:[#allocation2] sm:$0xff]
        %v976 = vld [vmem:[#allocation2 + $0x8] sm:$0xff]
        %v977 = vld [vmem:[#allocation2 + $0x10] sm:$0xff]
        %v978 = vld [vmem:[#allocation2 + $0x18] sm:$0xff]
        %v979 = vld [vmem:[#allocation2 + $0x20] sm:$0xff]
        %v980 = vld [vmem:[#allocation2 + $0x28] sm:$0xff]
        %v981 = vld [vmem:[#allocation2 + $0x30] sm:$0xff]
        %v982 = vld [vmem:[#allocation2 + $0x38] sm:$0xff]
        %v983 = vld [vmem:[#allocation2 + $0x40] sm:$0xff]
        %v984 = vld [vmem:[#allocation2 + $0x48] sm:$0xff]
        %v985 = vld [vmem:[#allocation2 + $0x50] sm:$0xff]
        %v986 = vld [vmem:[#allocation2 + $0x58] sm:$0xff]
        %v987 = vld [vmem:[#allocation2 + $0x60] sm:$0xff]
        %v988 = vld [vmem:[#allocation2 + $0x68] sm:$0xff]
        %v989 = vld [vmem:[#allocation2 + $0x70] sm:$0xff]
        %v990 = vld [vmem:[#allocation2 + $0x78] sm:$0xff]
        %v991 = vld [vmem:[%s3] sm:$0x1]
        %v992 = vld [vmem:[%s2] sm:$0xff]
        %v993 = vld [vmem:[%s2 + $0x8] sm:$0xff]
        %v994 = vld [vmem:[%s2 + $0x10] sm:$0xff]
        %v995 = vld [vmem:[%s2 + $0x18] sm:$0xff]
        %v996 = vld [vmem:[%s2 + $0x20] sm:$0xf]
        %v998 = vlaneseq
        %v999 = vshrl.u32 %v998, 7
        %v1000 = vsub.s32 0, %v999
        %v1001 = vrot.slane %v991, %v1000
        %vm1003 = vcmask 293888
        %v1005 = vsel %vm1003, %v975, 0
        %v1008 = vsel %vm1003, %v976, 0
        %v1011 = vsel %vm1003, %v977, 0
        %v1014 = vsel %vm1003, %v978, 0
        %v1017 = vsel %vm1003, %v979, 0
        %v1020 = vsel %vm1003, %v980, 0
        %v1023 = vsel %vm1003, %v981, 0
        %v1026 = vsel %vm1003, %v982, 0
        %v1029 = vsel %vm1003, %v983, 0
        %v1032 = vsel %vm1003, %v984, 0
        %v1035 = vsel %vm1003, %v985, 0
        %v1038 = vsel %vm1003, %v986, 0
        %v1041 = vsel %vm1003, %v987, 0
        %v1044 = vsel %vm1003, %v988, 0
        %v1047 = vsel %vm1003, %v989, 0
        %v1050 = vsel %vm1003, %v990, 0
        %vm1052 = vcmask 1043456
        %v1054 = vsel %vm1052, %v996, 0
        %1056 = vmatprep.subr.mxu0 0.0
        %1057 = vmatpush1.msra.mxu0 %v992
        %1058 = vmatprep.subr.mxu0 0.0
        %1059 = vmatpush1.msra.mxu0 %v993
        %1060 = vmatprep.subr.mxu0 0.0
        %1061 = vmatpush1.msra.mxu0 %v994
        %1062 = vmatprep.subr.mxu0 0.0
        %1063 = vmatpush1.msra.mxu0 %v995
        %1064 = vmatprep.subr.mxu0 0.0
        %1065 = vmatpush1.msra.mxu0 %v1054
        %1066 = vmatprep.subr.mxu0 0.0
        %1067 = vmatpush1.msra.mxu0 0.0
        %1068 = vmatprep.subr.mxu0 0.0
        %1069 = vmatpush1.msra.mxu0 0.0
        %1070 = vmatprep.subr.mxu0 0.0
        %1071 = vmatpush1.msra.mxu0 0.0
        %1072 = vmatprep.subr.mxu0 0.0
        %1073 = vmatpush1.msra.mxu0 0.0
        %1074 = vmatprep.subr.mxu0 0.0
        %1075 = vmatpush1.msra.mxu0 0.0
        %1076 = vmatprep.subr.mxu0 0.0
        %1077 = vmatpush1.msra.mxu0 0.0
        %1078 = vmatprep.subr.mxu0 0.0
        %1079 = vmatpush1.msra.mxu0 0.0
        %1080 = vmatprep.subr.mxu0 0.0
        %1081 = vmatpush1.msra.mxu0 0.0
        %1082 = vmatprep.subr.mxu0 0.0
        %1083 = vmatpush1.msra.mxu0 0.0
        %1084 = vmatprep.subr.mxu0 0.0
        %1085 = vmatpush1.msra.mxu0 0.0
        %1086 = vmatprep.subr.mxu0 0.0
        %1087 = vmatpush1.msra.mxu0 0.0
        %1088 = vmatprep.subr.mxu0 0.0
        %1089 = vmatpush1.msra.mxu0 0.0
        %1090 = vmatprep.subr.mxu0 0.0
        %1091 = vmatpush1.msra.mxu0 0.0
        %1092 = vmatprep.subr.mxu0 0.0
        %1093 = vmatpush1.msra.mxu0 0.0
        %1094 = vmatprep.subr.mxu0 0.0
        %1095 = vmatpush1.msra.mxu0 0.0
        %1096 = vmatprep.subr.mxu0 0.0
        %1097 = vmatpush1.msra.mxu0 0.0
        %1098 = vmatprep.subr.mxu0 0.0
        %1099 = vmatpush1.msra.mxu0 0.0
        %1100 = vmatprep.subr.mxu0 0.0
        %1101 = vmatpush1.msra.mxu0 0.0
        %1102 = vmatprep.subr.mxu0 0.0
        %1103 = vmatpush1.msra.mxu0 0.0
        %1104 = vmatprep.subr.mxu0 0.0
        %1105 = vmatpush1.msra.mxu0 0.0
        %1106 = vmatprep.subr.mxu0 0.0
        %1107 = vmatpush1.msra.mxu0 0.0
        %1108 = vmatprep.subr.mxu0 0.0
        %1109 = vmatpush1.msra.mxu0 0.0
        %1110 = vmatprep.subr.mxu0 0.0
        %1111 = vmatpush1.msra.mxu0 0.0
        %1112 = vmatprep.subr.mxu0 0.0
        %1113 = vmatpush1.msra.mxu0 0.0
        %1114 = vmatprep.subr.mxu0 0.0
        %1115 = vmatpush1.msra.mxu0 0.0
        %1116 = vmatprep.subr.mxu0 0.0
        %1117 = vmatpush1.msra.mxu0 0.0
        %1118 = vmatprep.subr.mxu0 0.0
        %1119 = vmatpush1.msra.mxu0 0.0
        %1120 = vmatprep.mubr.f32.mxu0 0.0
        %1121 = vmatmul.mubr.f32.gmra.mrb[0].mxu0 %v1005
        %v1122 = vpop.f32.mrb[0].mxu0
        %v1123 = vadd.f32 %v1001, %v1122
        %v1124 = vpop.f32.mrb[0].mxu0
        %1125 = vmatprep.mubr.f32.mxu0 0.0
        %1126 = vmatmul.mubr.f32.gmra.mrb[0].mxu0 %v1008
        %v1127 = vpop.f32.mrb[0].mxu0
        %v1128 = vadd.f32 %v1001, %v1127
        %v1129 = vpop.f32.mrb[0].mxu0
        %1130 = vmatprep.mubr.f32.mxu0 0.0
        %1131 = vmatmul.mubr.f32.gmra.mrb[0].mxu0 %v1011
        %v1132 = vpop.f32.mrb[0].mxu0
        %v1133 = vadd.f32 %v1001, %v1132
        %v1134 = vpop.f32.mrb[0].mxu0
        %1135 = vmatprep.mubr.f32.mxu0 0.0
        %1136 = vmatmul.mubr.f32.gmra.mrb[0].mxu0 %v1014
        %v1137 = vpop.f32.mrb[0].mxu0
        %v1138 = vadd.f32 %v1001, %v1137
        %v1139 = vpop.f32.mrb[0].mxu0
        %1140 = vmatprep.mubr.f32.mxu0 0.0
        %1141 = vmatmul.mubr.f32.gmra.mrb[0].mxu0 %v1017
        %v1142 = vpop.f32.mrb[0].mxu0
        %v1143 = vadd.f32 %v1001, %v1142
        %v1144 = vpop.f32.mrb[0].mxu0
        %1145 = vmatprep.mubr.f32.mxu0 0.0
        %1146 = vmatmul.mubr.f32.gmra.mrb[0].mxu0 %v1020
        %v1147 = vpop.f32.mrb[0].mxu0
        %v1148 = vadd.f32 %v1001, %v1147
        %v1149 = vpop.f32.mrb[0].mxu0
        %1150 = vmatprep.mubr.f32.mxu0 0.0
        %1151 = vmatmul.mubr.f32.gmra.mrb[0].mxu0 %v1023
        %v1152 = vpop.f32.mrb[0].mxu0
        %v1153 = vadd.f32 %v1001, %v1152
        %v1154 = vpop.f32.mrb[0].mxu0
        %1155 = vmatprep.mubr.f32.mxu0 0.0
        %1156 = vmatmul.mubr.f32.gmra.mrb[0].mxu0 %v1026
        %v1157 = vpop.f32.mrb[0].mxu0
        %v1158 = vadd.f32 %v1001, %v1157
        %v1159 = vpop.f32.mrb[0].mxu0
        %1160 = vmatprep.mubr.f32.mxu0 0.0
        %1161 = vmatmul.mubr.f32.gmra.mrb[0].mxu0 %v1029
        %v1162 = vpop.f32.mrb[0].mxu0
        %v1163 = vadd.f32 %v1001, %v1162
        %v1164 = vpop.f32.mrb[0].mxu0
        %1165 = vmatprep.mubr.f32.mxu0 0.0
        %1166 = vmatmul.mubr.f32.gmra.mrb[0].mxu0 %v1032
        %v1167 = vpop.f32.mrb[0].mxu0
        %v1168 = vadd.f32 %v1001, %v1167
        %v1169 = vpop.f32.mrb[0].mxu0
        %1170 = vmatprep.mubr.f32.mxu0 0.0
        %1171 = vmatmul.mubr.f32.gmra.mrb[0].mxu0 %v1035
        %v1172 = vpop.f32.mrb[0].mxu0
        %v1173 = vadd.f32 %v1001, %v1172
        %v1174 = vpop.f32.mrb[0].mxu0
        %1175 = vmatprep.mubr.f32.mxu0 0.0
        %1176 = vmatmul.mubr.f32.gmra.mrb[0].mxu0 %v1038
        %v1177 = vpop.f32.mrb[0].mxu0
        %v1178 = vadd.f32 %v1001, %v1177
        %v1179 = vpop.f32.mrb[0].mxu0
        %1180 = vmatprep.mubr.f32.mxu0 0.0
        %1181 = vmatmul.mubr.f32.gmra.mrb[0].mxu0 %v1041
        %v1182 = vpop.f32.mrb[0].mxu0
        %v1183 = vadd.f32 %v1001, %v1182
        %v1184 = vpop.f32.mrb[0].mxu0
        %1185 = vmatprep.mubr.f32.mxu0 0.0
        %1186 = vmatmul.mubr.f32.gmra.mrb[0].mxu0 %v1044
        %v1187 = vpop.f32.mrb[0].mxu0
        %v1188 = vadd.f32 %v1001, %v1187
        %v1189 = vpop.f32.mrb[0].mxu0
        %1190 = vmatprep.mubr.f32.mxu0 0.0
        %1191 = vmatmul.mubr.f32.gmra.mrb[0].mxu0 %v1047
        %v1192 = vpop.f32.mrb[0].mxu0
        %v1193 = vadd.f32 %v1001, %v1192
        %v1194 = vpop.f32.mrb[0].mxu0
        %1195 = vmatprep.mubr.f32.mxu0 0.0
        %1196 = vmatmul.mubr.f32.gmra.mrb[0].mxu0 %v1050
        %v1197 = vpop.f32.mrb[0].mxu0
        %v1198 = vadd.f32 %v1001, %v1197
        %v1199 = vpop.f32.mrb[0].mxu0
        %1200 = vdwg.mxu0
        %v1201 = vmax.f32 %v1123, 0.0
        %v1202 = vmax.f32 %v1128, 0.0
        %v1203 = vmax.f32 %v1133, 0.0
        %v1204 = vmax.f32 %v1138, 0.0
        %v1205 = vmax.f32 %v1143, 0.0
        %v1206 = vmax.f32 %v1148, 0.0
        %v1207 = vmax.f32 %v1153, 0.0
        %v1208 = vmax.f32 %v1158, 0.0
        %v1209 = vmax.f32 %v1163, 0.0
        %v1210 = vmax.f32 %v1168, 0.0
        %v1211 = vmax.f32 %v1173, 0.0
        %v1212 = vmax.f32 %v1178, 0.0
        %v1213 = vmax.f32 %v1183, 0.0
        %v1214 = vmax.f32 %v1188, 0.0
        %v1215 = vmax.f32 %v1193, 0.0
        %v1216 = vmax.f32 %v1198, 0.0
        %vm1217 = vcmask 130048
        %1218 = vst.msk [vmem:[%s250] sm:$0xff] %vm1217, %v1201
        %1219 = vst.msk [vmem:[%s250 + $0x8] sm:$0xff] %vm1217, %v1202
        %1220 = vst.msk [vmem:[%s250 + $0x20] sm:$0xff] %vm1217, %v1203
        %1221 = vst.msk [vmem:[%s250 + $0x28] sm:$0xff] %vm1217, %v1204
        %1222 = vst.msk [vmem:[%s250 + $0x40] sm:$0xff] %vm1217, %v1205
        %1223 = vst.msk [vmem:[%s250 + $0x48] sm:$0xff] %vm1217, %v1206
        %1224 = vst.msk [vmem:[%s250 + $0x60] sm:$0xff] %vm1217, %v1207
        %1225 = vst.msk [vmem:[%s250 + $0x68] sm:$0xff] %vm1217, %v1208
        %1226 = vst.msk [vmem:[%s250 + $0x80] sm:$0xff] %vm1217, %v1209
        %1227 = vst.msk [vmem:[%s250 + $0x88] sm:$0xff] %vm1217, %v1210
        %1228 = vst.msk [vmem:[%s250 + $0xa0] sm:$0xff] %vm1217, %v1211
        %1229 = vst.msk [vmem:[%s250 + $0xa8] sm:$0xff] %vm1217, %v1212
        %1230 = vst.msk [vmem:[%s250 + $0xc0] sm:$0xff] %vm1217, %v1213
        %1231 = vst.msk [vmem:[%s250 + $0xc8] sm:$0xff] %vm1217, %v1214
        %1232 = vst.msk [vmem:[%s250 + $0xe0] sm:$0xff] %vm1217, %v1215
        %1233 = vst.msk [vmem:[%s250 + $0xe8] sm:$0xff] %vm1217, %v1216
        %s1234 = scalar_lea.vmem %s2, 40
        %v1235 = vld [vmem:[%s1234] sm:$0xff]
        %v1236 = vld [vmem:[%s1234 + $0x8] sm:$0xff]
        %v1237 = vld [vmem:[%s1234 + $0x10] sm:$0xff]
        %v1238 = vld [vmem:[%s1234 + $0x18] sm:$0xff]
        %v1239 = vld [vmem:[%s1234 + $0x20] sm:$0xf]
        %v1241 = vsel %vm1052, %v1239, 0
        %1243 = vmatprep.subr.mxu0 0.0
        %1244 = vmatpush1.msra.mxu0 %v1235
        %1245 = vmatprep.subr.mxu0 0.0
        %1246 = vmatpush1.msra.mxu0 %v1236
        %1247 = vmatprep.subr.mxu0 0.0
        %1248 = vmatpush1.msra.mxu0 %v1237
        %1249 = vmatprep.subr.mxu0 0.0
        %1250 = vmatpush1.msra.mxu0 %v1238
        %1251 = vmatprep.subr.mxu0 0.0
        %1252 = vmatpush1.msra.mxu0 %v1241
        %1253 = vmatprep.subr.mxu0 0.0
        %1254 = vmatpush1.msra.mxu0 0.0
        %1255 = vmatprep.subr.mxu0 0.0
        %1256 = vmatpush1.msra.mxu0 0.0
        %1257 = vmatprep.subr.mxu0 0.0
        %1258 = vmatpush1.msra.mxu0 0.0
        %1259 = vmatprep.subr.mxu0 0.0
        %1260 = vmatpush1.msra.mxu0 0.0
        %1261 = vmatprep.subr.mxu0 0.0
        %1262 = vmatpush1.msra.mxu0 0.0
        %1263 = vmatprep.subr.mxu0 0.0
        %1264 = vmatpush1.msra.mxu0 0.0
        %1265 = vmatprep.subr.mxu0 0.0
        %1266 = vmatpush1.msra.mxu0 0.0
        %1267 = vmatprep.subr.mxu0 0.0
        %1268 = vmatpush1.msra.mxu0 0.0
        %1269 = vmatprep.subr.mxu0 0.0
        %1270 = vmatpush1.msra.mxu0 0.0
        %1271 = vmatprep.subr.mxu0 0.0
        %1272 = vmatpush1.msra.mxu0 0.0
        %1273 = vmatprep.subr.mxu0 0.0
        %1274 = vmatpush1.msra.mxu0 0.0
        %1275 = vmatprep.subr.mxu0 0.0
        %1276 = vmatpush1.msra.mxu0 0.0
        %1277 = vmatprep.subr.mxu0 0.0
        %1278 = vmatpush1.msra.mxu0 0.0
        %1279 = vmatprep.subr.mxu0 0.0
        %1280 = vmatpush1.msra.mxu0 0.0
        %1281 = vmatprep.subr.mxu0 0.0
        %1282 = vmatpush1.msra.mxu0 0.0
        %1283 = vmatprep.subr.mxu0 0.0
        %1284 = vmatpush1.msra.mxu0 0.0
        %1285 = vmatprep.subr.mxu0 0.0
        %1286 = vmatpush1.msra.mxu0 0.0
        %1287 = vmatprep.subr.mxu0 0.0
        %1288 = vmatpush1.msra.mxu0 0.0
        %1289 = vmatprep.subr.mxu0 0.0
        %1290 = vmatpush1.msra.mxu0 0.0
        %1291 = vmatprep.subr.mxu0 0.0
        %1292 = vmatpush1.msra.mxu0 0.0
        %1293 = vmatprep.subr.mxu0 0.0
        %1294 = vmatpush1.msra.mxu0 0.0
        %1295 = vmatprep.subr.mxu0 0.0
        %1296 = vmatpush1.msra.mxu0 0.0
        %1297 = vmatprep.subr.mxu0 0.0
        %1298 = vmatpush1.msra.mxu0 0.0
        %1299 = vmatprep.subr.mxu0 0.0
        %1300 = vmatpush1.msra.mxu0 0.0
        %1301 = vmatprep.subr.mxu0 0.0
        %1302 = vmatpush1.msra.mxu0 0.0
        %1303 = vmatprep.subr.mxu0 0.0
        %1304 = vmatpush1.msra.mxu0 0.0
        %1305 = vmatprep.subr.mxu0 0.0
        %1306 = vmatpush1.msra.mxu0 0.0
        %1307 = vmatprep.mubr.f32.mxu0 0.0
        %1308 = vmatmul.mubr.f32.gmra.mrb[0].mxu0 %v1005
        %v1309 = vpop.f32.mrb[0].mxu0
        %v1310 = vadd.f32 %v1001, %v1309
        %v1311 = vpop.f32.mrb[0].mxu0
        %1312 = vmatprep.mubr.f32.mxu0 0.0
        %1313 = vmatmul.mubr.f32.gmra.mrb[0].mxu0 %v1008
        %v1314 = vpop.f32.mrb[0].mxu0
        %v1315 = vadd.f32 %v1001, %v1314
        %v1316 = vpop.f32.mrb[0].mxu0
        %1317 = vmatprep.mubr.f32.mxu0 0.0
        %1318 = vmatmul.mubr.f32.gmra.mrb[0].mxu0 %v1011
        %v1319 = vpop.f32.mrb[0].mxu0
        %v1320 = vadd.f32 %v1001, %v1319
        %v1321 = vpop.f32.mrb[0].mxu0
        %1322 = vmatprep.mubr.f32.mxu0 0.0
        %1323 = vmatmul.mubr.f32.gmra.mrb[0].mxu0 %v1014
        %v1324 = vpop.f32.mrb[0].mxu0
        %v1325 = vadd.f32 %v1001, %v1324
        %v1326 = vpop.f32.mrb[0].mxu0
        %1327 = vmatprep.mubr.f32.mxu0 0.0
        %1328 = vmatmul.mubr.f32.gmra.mrb[0].mxu0 %v1017
        %v1329 = vpop.f32.mrb[0].mxu0
        %v1330 = vadd.f32 %v1001, %v1329
        %v1331 = vpop.f32.mrb[0].mxu0
        %1332 = vmatprep.mubr.f32.mxu0 0.0
        %1333 = vmatmul.mubr.f32.gmra.mrb[0].mxu0 %v1020
        %v1334 = vpop.f32.mrb[0].mxu0
        %v1335 = vadd.f32 %v1001, %v1334
        %v1336 = vpop.f32.mrb[0].mxu0
        %1337 = vmatprep.mubr.f32.mxu0 0.0
        %1338 = vmatmul.mubr.f32.gmra.mrb[0].mxu0 %v1023
        %v1339 = vpop.f32.mrb[0].mxu0
        %v1340 = vadd.f32 %v1001, %v1339
        %v1341 = vpop.f32.mrb[0].mxu0
        %1342 = vmatprep.mubr.f32.mxu0 0.0
        %1343 = vmatmul.mubr.f32.gmra.mrb[0].mxu0 %v1026
        %v1344 = vpop.f32.mrb[0].mxu0
        %v1345 = vadd.f32 %v1001, %v1344
        %v1346 = vpop.f32.mrb[0].mxu0
        %1347 = vmatprep.mubr.f32.mxu0 0.0
        %1348 = vmatmul.mubr.f32.gmra.mrb[0].mxu0 %v1029
        %v1349 = vpop.f32.mrb[0].mxu0
        %v1350 = vadd.f32 %v1001, %v1349
        %v1351 = vpop.f32.mrb[0].mxu0
        %1352 = vmatprep.mubr.f32.mxu0 0.0
        %1353 = vmatmul.mubr.f32.gmra.mrb[0].mxu0 %v1032
        %v1354 = vpop.f32.mrb[0].mxu0
        %v1355 = vadd.f32 %v1001, %v1354
        %v1356 = vpop.f32.mrb[0].mxu0
        %1357 = vmatprep.mubr.f32.mxu0 0.0
        %1358 = vmatmul.mubr.f32.gmra.mrb[0].mxu0 %v1035
        %v1359 = vpop.f32.mrb[0].mxu0
        %v1360 = vadd.f32 %v1001, %v1359
        %v1361 = vpop.f32.mrb[0].mxu0
        %1362 = vmatprep.mubr.f32.mxu0 0.0
        %1363 = vmatmul.mubr.f32.gmra.mrb[0].mxu0 %v1038
        %v1364 = vpop.f32.mrb[0].mxu0
        %v1365 = vadd.f32 %v1001, %v1364
        %v1366 = vpop.f32.mrb[0].mxu0
        %1367 = vmatprep.mubr.f32.mxu0 0.0
        %1368 = vmatmul.mubr.f32.gmra.mrb[0].mxu0 %v1041
        %v1369 = vpop.f32.mrb[0].mxu0
        %v1370 = vadd.f32 %v1001, %v1369
        %v1371 = vpop.f32.mrb[0].mxu0
        %1372 = vmatprep.mubr.f32.mxu0 0.0
        %1373 = vmatmul.mubr.f32.gmra.mrb[0].mxu0 %v1044
        %v1374 = vpop.f32.mrb[0].mxu0
        %v1375 = vadd.f32 %v1001, %v1374
        %v1376 = vpop.f32.mrb[0].mxu0
        %1377 = vmatprep.mubr.f32.mxu0 0.0
        %1378 = vmatmul.mubr.f32.gmra.mrb[0].mxu0 %v1047
        %v1379 = vpop.f32.mrb[0].mxu0
        %v1380 = vadd.f32 %v1001, %v1379
        %v1381 = vpop.f32.mrb[0].mxu0
        %1382 = vmatprep.mubr.f32.mxu0 0.0
        %1383 = vmatmul.mubr.f32.gmra.mrb[0].mxu0 %v1050
        %v1384 = vpop.f32.mrb[0].mxu0
        %v1385 = vadd.f32 %v1001, %v1384
        %v1386 = vpop.f32.mrb[0].mxu0
        %1387 = vdwg.mxu0
        %v1388 = vmax.f32 %v1310, 0.0
        %v1389 = vmax.f32 %v1315, 0.0
        %v1390 = vmax.f32 %v1320, 0.0
        %v1391 = vmax.f32 %v1325, 0.0
        %v1392 = vmax.f32 %v1330, 0.0
        %v1393 = vmax.f32 %v1335, 0.0
        %v1394 = vmax.f32 %v1340, 0.0
        %v1395 = vmax.f32 %v1345, 0.0
        %v1396 = vmax.f32 %v1350, 0.0
        %v1397 = vmax.f32 %v1355, 0.0
        %v1398 = vmax.f32 %v1360, 0.0
        %v1399 = vmax.f32 %v1365, 0.0
        %v1400 = vmax.f32 %v1370, 0.0
        %v1401 = vmax.f32 %v1375, 0.0
        %v1402 = vmax.f32 %v1380, 0.0
        %v1403 = vmax.f32 %v1385, 0.0
        %s1404 = scalar_lea.vmem %s250, 16 [#allocation3]
        %1405 = vst.msk [vmem:[%s1404] sm:$0xff] %vm1217, %v1388
        %1406 = vst.msk [vmem:[%s1404 + $0x8] sm:$0xff] %vm1217, %v1389
        %1407 = vst.msk [vmem:[%s1404 + $0x20] sm:$0xff] %vm1217, %v1390
        %1408 = vst.msk [vmem:[%s1404 + $0x28] sm:$0xff] %vm1217, %v1391
        %1409 = vst.msk [vmem:[%s1404 + $0x40] sm:$0xff] %vm1217, %v1392
        %1410 = vst.msk [vmem:[%s1404 + $0x48] sm:$0xff] %vm1217, %v1393
        %1411 = vst.msk [vmem:[%s1404 + $0x60] sm:$0xff] %vm1217, %v1394
        %1412 = vst.msk [vmem:[%s1404 + $0x68] sm:$0xff] %vm1217, %v1395
        %1413 = vst.msk [vmem:[%s1404 + $0x80] sm:$0xff] %vm1217, %v1396
        %1414 = vst.msk [vmem:[%s1404 + $0x88] sm:$0xff] %vm1217, %v1397
        %1415 = vst.msk [vmem:[%s1404 + $0xa0] sm:$0xff] %vm1217, %v1398
        %1416 = vst.msk [vmem:[%s1404 + $0xa8] sm:$0xff] %vm1217, %v1399
        %1417 = vst.msk [vmem:[%s1404 + $0xc0] sm:$0xff] %vm1217, %v1400
        %1418 = vst.msk [vmem:[%s1404 + $0xc8] sm:$0xff] %vm1217, %v1401
        %1419 = vst.msk [vmem:[%s1404 + $0xe0] sm:$0xff] %vm1217, %v1402
        %1420 = vst.msk [vmem:[%s1404 + $0xe8] sm:$0xff] %vm1217, %v1403
        %s1421 = sand.u32 %s140, 1
        %s1422 = scalar_lea.sflag [#allocation4], %s1421
        %s1423 = sand.u32 %s140, 1
        %s1424 = smul.addr %s1423, 256
        %s1425 = scalar_lea.vmem [#allocation3], %s1424
        // Predicated region
        $region37: #{tpu_custom_call.1} parent=35 // pred_check
          %p1426 = pneg %p150
        $region38: #{tpu_custom_call.1} parent=35 // pred_check_branch
          %1428 = sbr.rel (%p1426) target = $region40
        $region39: #{tpu_custom_call.1} parent=35 // pred_region
          %s1429 = smul.u32 8, %s23
          %s1431 = ssub.s32 4096, 4096
          %1432 = vsyncadd %s1422, %s1431
          %s1433 = smul.addr %s1429, 4
          %s1434 = smul.addr %s22, 64
          %s1435 = sadd.s32 %s1433, %s1434
          %s1436 = smul.addr %s1435, 128
          %s1437 = scalar_lea.hbm %s4, %s1436
          %s1438 = sshll.u32 %s1425, 4
          %s1439 = int_to_ptr.vmem [resolvable:$true] %s1438
          %1444 = dma.vmem_to_hbm [thread:$0]  %s1439, 4096, %s1437, %s1422, 128, 128, 8
        $region40: #{tpu_custom_call.1} parent=35 // pred_fallthru
          _
      $region36: #{tpu_custom_call.1} parent=5 // pred_fallthru
        _
      %p1445 = scmp.le.s32.totalorder 2, %s13
      // Predicated region
      $region41: #{tpu_custom_call.1} parent=5 // pred_check
        %p1446 = pneg %p1445
      $region42: #{tpu_custom_call.1} parent=5 // pred_check_branch
        %1448 = sbr.rel (%p1446) target = $region44
      $region43: #{tpu_custom_call.1} parent=5 // pred_region
        %s1449 = ssub.s32 %s13, 2
        // Predicated region
        $region45: #{tpu_custom_call.1} parent=43 // pred_check
          %p1450 = pneg %p156
        $region46: #{tpu_custom_call.1} parent=43 // pred_check_branch
          %1452 = sbr.rel (%p1450) target = $region48
        $region47: #{tpu_custom_call.1} parent=43 // pred_region
          %s1453 = sand.u32 %s141, 1
          %s1454 = scalar_lea.sflag [#allocation4], %s1453
          %s1455 = sand.u32 %s141, 1
          %s1456 = smul.addr %s1455, 256
          %s1457 = scalar_lea.vmem [#allocation3], %s1456
          %1458 = dma.done %s1454, 4096
        $region48: #{tpu_custom_call.1} parent=43 // pred_fallthru
          _
      $region44: #{tpu_custom_call.1} parent=5 // pred_fallthru
        _
    $region6: #{tpu_custom_call.1} parent=1 // loop_footer
      %s17 = sadd.s32 1, %s13
    $region7: #{tpu_custom_call.1} parent=1 // loop_footer_branch
      %12 = sbr.rel target = $region3
    $region8: #{tpu_custom_call.1} parent=1 // loop_exit
      _
    %1459 = vsyncpa [#allocation4], 1
    %s1460 = scalar_lea.sflag [#allocation4], 1
    %1461 = vsyncpa %s1460, 1

</llo_original>
